<compile_context>
chip_gen: v7x
topology: tpu7x:2x2x1
jax: 0.10.0
libtpu: 0.0.40
codegen_flags: <defaults>
</compile_context>

<pallas_src>
import functools

import jax
import jax.numpy as jnp
import numpy as np
from jax import lax
from jax.experimental import pallas as pl
from jax.experimental.pallas import tpu as pltpu


def _encoder_kernel(*refs, stage_meta):
    """Fused [Conv2d(4,2,1) -> BatchNorm2d(batch stats) -> ReLU] x n_stages.

    refs = (x_ref, [r_ref, m_ref, gamma_ref, beta_ref] * n_stages, o_ref)

    The running activation `h` is a 2-D (N*H, W*C) array (channel-minor
    lanes) and lives entirely on-chip between stages.
    """
    x_ref = refs[0]
    o_ref = refs[-1]
    h = x_ref[...]
    for s, (inv_cnt, wo, cout) in enumerate(stage_meta):
        r_ref, m_ref, g_ref, b_ref = refs[1 + 4 * s:1 + 4 * (s + 1)]

        # --- Conv2d(k=4, s=2, p=1); conv bias dropped (cancelled by BN mean).
        #     y = sum_k  R_k @ h @ M_k  (all MXU, no shifts/concats needed).
        y = None
        for k in range(4):
            a = jnp.dot(r_ref[k], h, preferred_element_type=jnp.float32)
            t = jnp.dot(a, m_ref[k], preferred_element_type=jnp.float32)
            y = t if y is None else y + t

        # --- BatchNorm2d (training-mode biased batch stats) + ReLU, fused. ---
        rsum = jnp.sum(y, axis=0, keepdims=True)            # (1, Wo*Cout)
        rsq = jnp.sum(y * y, axis=0, keepdims=True)         # (1, Wo*Cout)
        ch_s = rsum[:, 0:cout]                               # fold spatial lanes
        ch_q = rsq[:, 0:cout]
        for j in range(1, wo):
            ch_s = ch_s + rsum[:, j * cout:(j + 1) * cout]
            ch_q = ch_q + rsq[:, j * cout:(j + 1) * cout]
        mean = ch_s * inv_cnt                                # (1, Cout)
        var = ch_q * inv_cnt - mean * mean                   # one-pass variance
        scale = g_ref[...] * lax.rsqrt(var + 1e-5)
        bias = b_ref[...] - mean * scale
        scale_f = jnp.concatenate([scale] * wo, axis=1)      # (1, Wo*Cout)
        bias_f = jnp.concatenate([bias] * wo, axis=1)
        h = jnp.maximum(y * scale_f + bias_f, 0.0)           # single FMA + ReLU

    o_ref[...] = h.astype(o_ref.dtype)


def _pack_stage(w, H, W, N):
    """Pack a Conv2d(Cout,Cin,4,4) weight into R_k (row select) / M_k (lane mix)."""
    cout, cin, kh, kw = w.shape
    assert (kh, kw) == (4, 4) and H % 2 == 0 and W % 2 == 0
    ho, wo = H // 2, W // 2
    # R[k, i, h] = 1  iff  h == 2*i + k - 1  (zero rows implement padding=1);
    # block-diagonal over the batch so rows never mix across samples.
    r = np.zeros((4, ho, H), np.float32)
    for k in range(4):
        for i in range(ho):
            hh = 2 * i + k - 1
            if 0 <= hh < H:
                r[k, i, hh] = 1.0
    eye = np.eye(N, dtype=np.float32)
    rb = np.stack([np.kron(eye, r[k]) for k in range(4)])    # (4, N*ho, N*H)
    # M[k, q*Cin+ci, j*Cout+co] = w[co, ci, k, q - 2j + 1]   (0 outside the tap)
    m = np.zeros((4, W * cin, wo * cout), np.float32)
    wn = np.asarray(w)
    for k in range(4):
        for j in range(wo):
            for kx in range(4):
                q = 2 * j + kx - 1
                if 0 <= q < W:
                    m[k, q * cin:(q + 1) * cin, j * cout:(j + 1) * cout] = \
                        wn[:, :, k, kx].T
    return rb, m


class PallasEncoder:
    """Pallas port of hw7/model.py::Encoder for all-'down' configs."""

    def __init__(self, config, key):
        layer_count = (len(config) - 1) // 2
        self.layers = []
        for i in range(layer_count):
            in_c = config[2 * i]
            conv_type = config[2 * i + 1]
            out_c = config[2 * i + 2]
            if conv_type != "down":
                # TODO(synk): the reference 'conv' branch passes `lernel_size=3`
                # (typo -> TypeError in PyTorch), so it cannot be implemented.
                raise NotImplementedError("only 'down' (stride-2 Conv2d) layers")
            key, kw, kb = jax.random.split(key, 3)
            bound = 1.0 / np.sqrt(in_c * 4 * 4)      # PyTorch-default uniform init
            w = jax.random.uniform(kw, (out_c, in_c, 4, 4), jnp.float32,
                                   -bound, bound)
            b = jax.random.uniform(kb, (out_c,), jnp.float32, -bound, bound)
            gamma = jnp.ones((out_c,), jnp.float32)   # BatchNorm2d defaults
            beta = jnp.zeros((out_c,), jnp.float32)
            # b is only used by the XLA reference: it is mathematically a no-op
            # because training-mode BN subtracts the batch mean right after.
            self.layers.append((w, b, gamma, beta))
        self._cache = {}

    def _build(self, N, C, H, W):
        cache_key = (N, C, H, W)
        if cache_key in self._cache:
            return self._cache[cache_key]

        args, stage_meta = [], []
        h_sp, w_sp, c_in = H, W, C
        for (w, _b, gamma, beta) in self.layers:
            cout = w.shape[0]
            assert w.shape[1] == c_in, "config/channel mismatch"
            rb, m = _pack_stage(np.asarray(w), h_sp, w_sp, N)
            ho, wo = h_sp // 2, w_sp // 2
            args += [jnp.asarray(rb), jnp.asarray(m),
                     jnp.asarray(gamma).reshape(1, cout),
                     jnp.asarray(beta).reshape(1, cout)]
            stage_meta.append((1.0 / float(N * ho * wo), wo, cout))
            h_sp, w_sp, c_in = ho, wo, cout

        out_shape = (N * h_sp, w_sp * c_in)
        in_shapes = [(N * H, W * C)] + [tuple(a.shape) for a in args]
        kernel = functools.partial(_encoder_kernel, stage_meta=tuple(stage_meta))

        def zmap(nd):
            return lambda i: (0,) * nd

        call = pl.pallas_call(
            kernel,
            out_shape=jax.ShapeDtypeStruct(out_shape, jnp.float32),
            grid=(1,),
            in_specs=[pl.BlockSpec(s, zmap(len(s))) for s in in_shapes],
            out_specs=pl.BlockSpec(out_shape, zmap(len(out_shape))),
            compiler_params=pltpu.CompilerParams(
                dimension_semantics=("arbitrary",)),
        )

        nl = len(self.layers)
        cf, hf, wf = c_in, h_sp, w_sp

        def forward(x, *packed):
            # NCHW -> channel-minor 2-D (N*H, W*C) for the kernel.
            xr = jnp.transpose(x, (0, 2, 3, 1)).astype(jnp.float32)
            xr = xr.reshape(N * H, W * C)
            y2d = call(xr, *packed)
            # Back to PyTorch's NCHW flatten: out.view(N, -1).
            y = y2d.reshape(N, hf, wf, cf).transpose(0, 3, 1, 2)
            return y.reshape(N, cf * hf * wf)

        entry = (jax.jit(forward), tuple(args))
        self._cache[cache_key] = entry
        return entry

    def __call__(self, x):
        N, C, H, W = x.shape
        fn, packed = self._build(N, C, H, W)
        return fn(x, *packed)


def encoder_reference(x, layers):
    """Pure-JAX (XLA) reference mirroring the PyTorch semantics (NCHW)."""
    h = x.astype(jnp.float32)
    for (w, b, gamma, beta) in layers:
        h = lax.conv_general_dilated(
            h, w, window_strides=(2, 2), padding=((1, 1), (1, 1)),
            dimension_numbers=("NCHW", "OIHW", "NCHW"))
        h = h + b[None, :, None, None]   # cancelled by BN mean; kept for fidelity
        mean = h.mean(axis=(0, 2, 3), keepdims=True)
        var = ((h - mean) ** 2).mean(axis=(0, 2, 3), keepdims=True)
        h = (h - mean) * lax.rsqrt(var + 1e-5)
        h = h * gamma[None, :, None, None] + beta[None, :, None, None]
        h = jnp.maximum(h, 0.0)
    return h.reshape(h.shape[0], -1)


if __name__ == "__main__":
    key = jax.random.PRNGKey(0)
    kparam, kx = jax.random.split(key)
    # Three stride-2 'down' stages: (2, 4, 16, 16) -> (2, 32, 2, 2) -> (2, 128)
    config = [4, "down", 8, "down", 16, "down", 32]
    enc = PallasEncoder(config, kparam)
    x = jax.random.normal(kx, (2, 4, 16, 16), jnp.float32)

    out = jax.block_until_ready(enc(x))
    assert out.shape == (2, 32 * 2 * 2), out.shape

    ref = jax.block_until_ready(encoder_reference(x, enc.layers))
    np.testing.assert_allclose(np.asarray(out), np.asarray(ref),
                               rtol=1e-4, atol=1e-4)
    print("KERNEL_OK")
</pallas_src>

<mosaic_0001>
module attributes {stable_mosaic.version = 11 : i64} {
  func.func @_encoder_kernel(%arg0: i32, %arg1: memref<32x64xf32, #tpu.memory_space<vmem>>, %arg2: memref<4x16x32xf32, #tpu.memory_space<vmem>>, %arg3: memref<4x64x64xf32, #tpu.memory_space<vmem>>, %arg4: memref<1x8xf32, #tpu.memory_space<vmem>>, %arg5: memref<1x8xf32, #tpu.memory_space<vmem>>, %arg6: memref<4x8x16xf32, #tpu.memory_space<vmem>>, %arg7: memref<4x64x64xf32, #tpu.memory_space<vmem>>, %arg8: memref<1x16xf32, #tpu.memory_space<vmem>>, %arg9: memref<1x16xf32, #tpu.memory_space<vmem>>, %arg10: memref<4x4x8xf32, #tpu.memory_space<vmem>>, %arg11: memref<4x64x64xf32, #tpu.memory_space<vmem>>, %arg12: memref<1x32xf32, #tpu.memory_space<vmem>>, %arg13: memref<1x32xf32, #tpu.memory_space<vmem>>, %arg14: memref<4x64xf32, #tpu.memory_space<vmem>>) attributes {dimension_semantics = [#tpu.dimension_semantics<arbitrary>], iteration_bounds = array<i64: 1>, scalar_prefetch = 0 : i64, scratch_operands = 0 : i64, tpu.core_type = #tpu.core_type<tc>, window_params = [{pipeline_mode = #tpu.pipeline_mode<synchronous>, transform_indices = @transform_0, window_bounds = array<i64: 32, 64>}, {pipeline_mode = #tpu.pipeline_mode<synchronous>, transform_indices = @transform_1, window_bounds = array<i64: 4, 16, 32>}, {pipeline_mode = #tpu.pipeline_mode<synchronous>, transform_indices = @transform_2, window_bounds = array<i64: 4, 64, 64>}, {pipeline_mode = #tpu.pipeline_mode<synchronous>, transform_indices = @transform_3, window_bounds = array<i64: 1, 8>}, {pipeline_mode = #tpu.pipeline_mode<synchronous>, transform_indices = @transform_4, window_bounds = array<i64: 1, 8>}, {pipeline_mode = #tpu.pipeline_mode<synchronous>, transform_indices = @transform_5, window_bounds = array<i64: 4, 8, 16>}, {pipeline_mode = #tpu.pipeline_mode<synchronous>, transform_indices = @transform_6, window_bounds = array<i64: 4, 64, 64>}, {pipeline_mode = #tpu.pipeline_mode<synchronous>, transform_indices = @transform_7, window_bounds = array<i64: 1, 16>}, {pipeline_mode = #tpu.pipeline_mode<synchronous>, transform_indices = @transform_8, window_bounds = array<i64: 1, 16>}, {pipeline_mode = #tpu.pipeline_mode<synchronous>, transform_indices = @transform_9, window_bounds = array<i64: 4, 4, 8>}, {pipeline_mode = #tpu.pipeline_mode<synchronous>, transform_indices = @transform_10, window_bounds = array<i64: 4, 64, 64>}, {pipeline_mode = #tpu.pipeline_mode<synchronous>, transform_indices = @transform_11, window_bounds = array<i64: 1, 32>}, {pipeline_mode = #tpu.pipeline_mode<synchronous>, transform_indices = @transform_12, window_bounds = array<i64: 1, 32>}, {pipeline_mode = #tpu.pipeline_mode<synchronous>, transform_indices = @transform_13, window_bounds = array<i64: 4, 64>}]} {
    %c0 = arith.constant 0 : index
    %c0_0 = arith.constant 0 : index
    %0 = vector.load %arg1[%c0, %c0_0] : memref<32x64xf32, #tpu.memory_space<vmem>>, vector<32x64xf32>
    %c0_1 = arith.constant 0 : index
    %c0_2 = arith.constant 0 : index
    %c0_3 = arith.constant 0 : index
    %1 = vector.load %arg2[%c0_1, %c0_2, %c0_3] : memref<4x16x32xf32, #tpu.memory_space<vmem>>, vector<1x16x32xf32>
    %2 = vector.shape_cast %1 : vector<1x16x32xf32> to vector<16x32xf32>
    %cst = arith.constant dense<0.000000e+00> : vector<16x64xf32>
    %3 = tpu.matmul %2, %0, %cst {dimension_numbers = #tpu.dot_dimension_numbers<[1], [0], [0], [1], [0, 0, 1, 1], [], []>} : vector<16x32xf32>, vector<32x64xf32>, vector<16x64xf32> -> vector<16x64xf32>
    %c0_4 = arith.constant 0 : index
    %c0_5 = arith.constant 0 : index
    %c0_6 = arith.constant 0 : index
    %4 = vector.load %arg3[%c0_4, %c0_5, %c0_6] : memref<4x64x64xf32, #tpu.memory_space<vmem>>, vector<1x64x64xf32>
    %5 = vector.shape_cast %4 : vector<1x64x64xf32> to vector<64x64xf32>
    %cst_7 = arith.constant dense<0.000000e+00> : vector<16x64xf32>
    %6 = tpu.matmul %3, %5, %cst_7 {dimension_numbers = #tpu.dot_dimension_numbers<[1], [0], [0], [1], [0, 0, 1, 1], [], []>} : vector<16x64xf32>, vector<64x64xf32>, vector<16x64xf32> -> vector<16x64xf32>
    %c1 = arith.constant 1 : index
    %c0_8 = arith.constant 0 : index
    %c0_9 = arith.constant 0 : index
    %7 = vector.load %arg2[%c1, %c0_8, %c0_9] : memref<4x16x32xf32, #tpu.memory_space<vmem>>, vector<1x16x32xf32>
    %8 = vector.shape_cast %7 : vector<1x16x32xf32> to vector<16x32xf32>
    %cst_10 = arith.constant dense<0.000000e+00> : vector<16x64xf32>
    %9 = tpu.matmul %8, %0, %cst_10 {dimension_numbers = #tpu.dot_dimension_numbers<[1], [0], [0], [1], [0, 0, 1, 1], [], []>} : vector<16x32xf32>, vector<32x64xf32>, vector<16x64xf32> -> vector<16x64xf32>
    %c1_11 = arith.constant 1 : index
    %c0_12 = arith.constant 0 : index
    %c0_13 = arith.constant 0 : index
    %10 = vector.load %arg3[%c1_11, %c0_12, %c0_13] : memref<4x64x64xf32, #tpu.memory_space<vmem>>, vector<1x64x64xf32>
    %11 = vector.shape_cast %10 : vector<1x64x64xf32> to vector<64x64xf32>
    %cst_14 = arith.constant dense<0.000000e+00> : vector<16x64xf32>
    %12 = tpu.matmul %9, %11, %cst_14 {dimension_numbers = #tpu.dot_dimension_numbers<[1], [0], [0], [1], [0, 0, 1, 1], [], []>} : vector<16x64xf32>, vector<64x64xf32>, vector<16x64xf32> -> vector<16x64xf32>
    %13 = arith.addf %6, %12 : vector<16x64xf32>
    %c2 = arith.constant 2 : index
    %c0_15 = arith.constant 0 : index
    %c0_16 = arith.constant 0 : index
    %14 = vector.load %arg2[%c2, %c0_15, %c0_16] : memref<4x16x32xf32, #tpu.memory_space<vmem>>, vector<1x16x32xf32>
    %15 = vector.shape_cast %14 : vector<1x16x32xf32> to vector<16x32xf32>
    %cst_17 = arith.constant dense<0.000000e+00> : vector<16x64xf32>
    %16 = tpu.matmul %15, %0, %cst_17 {dimension_numbers = #tpu.dot_dimension_numbers<[1], [0], [0], [1], [0, 0, 1, 1], [], []>} : vector<16x32xf32>, vector<32x64xf32>, vector<16x64xf32> -> vector<16x64xf32>
    %c2_18 = arith.constant 2 : index
    %c0_19 = arith.constant 0 : index
    %c0_20 = arith.constant 0 : index
    %17 = vector.load %arg3[%c2_18, %c0_19, %c0_20] : memref<4x64x64xf32, #tpu.memory_space<vmem>>, vector<1x64x64xf32>
    %18 = vector.shape_cast %17 : vector<1x64x64xf32> to vector<64x64xf32>
    %cst_21 = arith.constant dense<0.000000e+00> : vector<16x64xf32>
    %19 = tpu.matmul %16, %18, %cst_21 {dimension_numbers = #tpu.dot_dimension_numbers<[1], [0], [0], [1], [0, 0, 1, 1], [], []>} : vector<16x64xf32>, vector<64x64xf32>, vector<16x64xf32> -> vector<16x64xf32>
    %20 = arith.addf %13, %19 : vector<16x64xf32>
    %c3 = arith.constant 3 : index
    %c0_22 = arith.constant 0 : index
    %c0_23 = arith.constant 0 : index
    %21 = vector.load %arg2[%c3, %c0_22, %c0_23] : memref<4x16x32xf32, #tpu.memory_space<vmem>>, vector<1x16x32xf32>
    %22 = vector.shape_cast %21 : vector<1x16x32xf32> to vector<16x32xf32>
    %cst_24 = arith.constant dense<0.000000e+00> : vector<16x64xf32>
    %23 = tpu.matmul %22, %0, %cst_24 {dimension_numbers = #tpu.dot_dimension_numbers<[1], [0], [0], [1], [0, 0, 1, 1], [], []>} : vector<16x32xf32>, vector<32x64xf32>, vector<16x64xf32> -> vector<16x64xf32>
    %c3_25 = arith.constant 3 : index
    %c0_26 = arith.constant 0 : index
    %c0_27 = arith.constant 0 : index
    %24 = vector.load %arg3[%c3_25, %c0_26, %c0_27] : memref<4x64x64xf32, #tpu.memory_space<vmem>>, vector<1x64x64xf32>
    %25 = vector.shape_cast %24 : vector<1x64x64xf32> to vector<64x64xf32>
    %cst_28 = arith.constant dense<0.000000e+00> : vector<16x64xf32>
    %26 = tpu.matmul %23, %25, %cst_28 {dimension_numbers = #tpu.dot_dimension_numbers<[1], [0], [0], [1], [0, 0, 1, 1], [], []>} : vector<16x64xf32>, vector<64x64xf32>, vector<16x64xf32> -> vector<16x64xf32>
    %27 = arith.addf %20, %26 : vector<16x64xf32>
    %cst_29 = arith.constant dense<0.000000e+00> : vector<64xf32>
    %28 = vector.multi_reduction <add>, %27, %cst_29 [0] : vector<16x64xf32> to vector<64xf32>
    %29 = vector.shape_cast %28 : vector<64xf32> to vector<1x64xf32>
    %30 = arith.mulf %27, %27 : vector<16x64xf32>
    %cst_30 = arith.constant dense<0.000000e+00> : vector<64xf32>
    %31 = vector.multi_reduction <add>, %30, %cst_30 [0] : vector<16x64xf32> to vector<64xf32>
    %32 = vector.shape_cast %31 : vector<64xf32> to vector<1x64xf32>
    %33 = vector.extract_strided_slice %29 {offsets = [0, 0], sizes = [1, 8], strides = [1, 1]} : vector<1x64xf32> to vector<1x8xf32>
    %34 = vector.extract_strided_slice %32 {offsets = [0, 0], sizes = [1, 8], strides = [1, 1]} : vector<1x64xf32> to vector<1x8xf32>
    %35 = vector.extract_strided_slice %29 {offsets = [0, 8], sizes = [1, 8], strides = [1, 1]} : vector<1x64xf32> to vector<1x8xf32>
    %36 = arith.addf %33, %35 : vector<1x8xf32>
    %37 = vector.extract_strided_slice %32 {offsets = [0, 8], sizes = [1, 8], strides = [1, 1]} : vector<1x64xf32> to vector<1x8xf32>
    %38 = arith.addf %34, %37 : vector<1x8xf32>
    %39 = vector.extract_strided_slice %29 {offsets = [0, 16], sizes = [1, 8], strides = [1, 1]} : vector<1x64xf32> to vector<1x8xf32>
    %40 = arith.addf %36, %39 : vector<1x8xf32>
    %41 = vector.extract_strided_slice %32 {offsets = [0, 16], sizes = [1, 8], strides = [1, 1]} : vector<1x64xf32> to vector<1x8xf32>
    %42 = arith.addf %38, %41 : vector<1x8xf32>
    %43 = vector.extract_strided_slice %29 {offsets = [0, 24], sizes = [1, 8], strides = [1, 1]} : vector<1x64xf32> to vector<1x8xf32>
    %44 = arith.addf %40, %43 : vector<1x8xf32>
    %45 = vector.extract_strided_slice %32 {offsets = [0, 24], sizes = [1, 8], strides = [1, 1]} : vector<1x64xf32> to vector<1x8xf32>
    %46 = arith.addf %42, %45 : vector<1x8xf32>
    %47 = vector.extract_strided_slice %29 {offsets = [0, 32], sizes = [1, 8], strides = [1, 1]} : vector<1x64xf32> to vector<1x8xf32>
    %48 = arith.addf %44, %47 : vector<1x8xf32>
    %49 = vector.extract_strided_slice %32 {offsets = [0, 32], sizes = [1, 8], strides = [1, 1]} : vector<1x64xf32> to vector<1x8xf32>
    %50 = arith.addf %46, %49 : vector<1x8xf32>
    %51 = vector.extract_strided_slice %29 {offsets = [0, 40], sizes = [1, 8], strides = [1, 1]} : vector<1x64xf32> to vector<1x8xf32>
    %52 = arith.addf %48, %51 : vector<1x8xf32>
    %53 = vector.extract_strided_slice %32 {offsets = [0, 40], sizes = [1, 8], strides = [1, 1]} : vector<1x64xf32> to vector<1x8xf32>
    %54 = arith.addf %50, %53 : vector<1x8xf32>
    %55 = vector.extract_strided_slice %29 {offsets = [0, 48], sizes = [1, 8], strides = [1, 1]} : vector<1x64xf32> to vector<1x8xf32>
    %56 = arith.addf %52, %55 : vector<1x8xf32>
    %57 = vector.extract_strided_slice %32 {offsets = [0, 48], sizes = [1, 8], strides = [1, 1]} : vector<1x64xf32> to vector<1x8xf32>
    %58 = arith.addf %54, %57 : vector<1x8xf32>
    %59 = vector.extract_strided_slice %29 {offsets = [0, 56], sizes = [1, 8], strides = [1, 1]} : vector<1x64xf32> to vector<1x8xf32>
    %60 = arith.addf %56, %59 : vector<1x8xf32>
    %61 = vector.extract_strided_slice %32 {offsets = [0, 56], sizes = [1, 8], strides = [1, 1]} : vector<1x64xf32> to vector<1x8xf32>
    %62 = arith.addf %58, %61 : vector<1x8xf32>
    %cst_31 = arith.constant 7.812500e-03 : f32
    %63 = vector.broadcast %cst_31 : f32 to vector<1x8xf32>
    %64 = arith.mulf %60, %63 : vector<1x8xf32>
    %cst_32 = arith.constant 7.812500e-03 : f32
    %65 = vector.broadcast %cst_32 : f32 to vector<1x8xf32>
    %66 = arith.mulf %62, %65 : vector<1x8xf32>
    %67 = arith.mulf %64, %64 : vector<1x8xf32>
    %68 = arith.subf %66, %67 : vector<1x8xf32>
    %c0_33 = arith.constant 0 : index
    %c0_34 = arith.constant 0 : index
    %69 = vector.load %arg4[%c0_33, %c0_34] : memref<1x8xf32, #tpu.memory_space<vmem>>, vector<1x8xf32>
    %cst_35 = arith.constant 9.99999974E-6 : f32
    %70 = vector.broadcast %cst_35 : f32 to vector<1x8xf32>
    %71 = arith.addf %68, %70 : vector<1x8xf32>
    %72 = math.rsqrt %71 : vector<1x8xf32>
    %73 = arith.mulf %69, %72 : vector<1x8xf32>
    %c0_36 = arith.constant 0 : index
    %c0_37 = arith.constant 0 : index
    %74 = vector.load %arg5[%c0_36, %c0_37] : memref<1x8xf32, #tpu.memory_space<vmem>>, vector<1x8xf32>
    %75 = arith.mulf %64, %73 : vector<1x8xf32>
    %76 = arith.subf %74, %75 : vector<1x8xf32>
    %77 = tpu.concatenate %73, %73, %73, %73, %73, %73, %73, %73 in 1 : vector<1x8xf32>, vector<1x8xf32>, vector<1x8xf32>, vector<1x8xf32>, vector<1x8xf32>, vector<1x8xf32>, vector<1x8xf32>, vector<1x8xf32> -> vector<1x64xf32>
    %78 = tpu.concatenate %76, %76, %76, %76, %76, %76, %76, %76 in 1 : vector<1x8xf32>, vector<1x8xf32>, vector<1x8xf32>, vector<1x8xf32>, vector<1x8xf32>, vector<1x8xf32>, vector<1x8xf32>, vector<1x8xf32> -> vector<1x64xf32>
    %79 = vector.broadcast %77 : vector<1x64xf32> to vector<16x64xf32>
    %80 = arith.mulf %27, %79 : vector<16x64xf32>
    %81 = vector.broadcast %78 : vector<1x64xf32> to vector<16x64xf32>
    %82 = arith.addf %80, %81 : vector<16x64xf32>
    %cst_38 = arith.constant 0.000000e+00 : f32
    %83 = vector.broadcast %cst_38 : f32 to vector<16x64xf32>
    %84 = arith.maximumf %82, %83 : vector<16x64xf32>
    %c0_39 = arith.constant 0 : index
    %c0_40 = arith.constant 0 : index
    %c0_41 = arith.constant 0 : index
    %85 = vector.load %arg6[%c0_39, %c0_40, %c0_41] : memref<4x8x16xf32, #tpu.memory_space<vmem>>, vector<1x8x16xf32>
    %86 = vector.shape_cast %85 : vector<1x8x16xf32> to vector<8x16xf32>
    %cst_42 = arith.constant dense<0.000000e+00> : vector<8x64xf32>
    %87 = tpu.matmul %86, %84, %cst_42 {dimension_numbers = #tpu.dot_dimension_numbers<[1], [0], [0], [1], [0, 0, 1, 1], [], []>} : vector<8x16xf32>, vector<16x64xf32>, vector<8x64xf32> -> vector<8x64xf32>
    %c0_43 = arith.constant 0 : index
    %c0_44 = arith.constant 0 : index
    %c0_45 = arith.constant 0 : index
    %88 = vector.load %arg7[%c0_43, %c0_44, %c0_45] : memref<4x64x64xf32, #tpu.memory_space<vmem>>, vector<1x64x64xf32>
    %89 = vector.shape_cast %88 : vector<1x64x64xf32> to vector<64x64xf32>
    %cst_46 = arith.constant dense<0.000000e+00> : vector<8x64xf32>
    %90 = tpu.matmul %87, %89, %cst_46 {dimension_numbers = #tpu.dot_dimension_numbers<[1], [0], [0], [1], [0, 0, 1, 1], [], []>} : vector<8x64xf32>, vector<64x64xf32>, vector<8x64xf32> -> vector<8x64xf32>
    %c1_47 = arith.constant 1 : index
    %c0_48 = arith.constant 0 : index
    %c0_49 = arith.constant 0 : index
    %91 = vector.load %arg6[%c1_47, %c0_48, %c0_49] : memref<4x8x16xf32, #tpu.memory_space<vmem>>, vector<1x8x16xf32>
    %92 = vector.shape_cast %91 : vector<1x8x16xf32> to vector<8x16xf32>
    %cst_50 = arith.constant dense<0.000000e+00> : vector<8x64xf32>
    %93 = tpu.matmul %92, %84, %cst_50 {dimension_numbers = #tpu.dot_dimension_numbers<[1], [0], [0], [1], [0, 0, 1, 1], [], []>} : vector<8x16xf32>, vector<16x64xf32>, vector<8x64xf32> -> vector<8x64xf32>
    %c1_51 = arith.constant 1 : index
    %c0_52 = arith.constant 0 : index
    %c0_53 = arith.constant 0 : index
    %94 = vector.load %arg7[%c1_51, %c0_52, %c0_53] : memref<4x64x64xf32, #tpu.memory_space<vmem>>, vector<1x64x64xf32>
    %95 = vector.shape_cast %94 : vector<1x64x64xf32> to vector<64x64xf32>
    %cst_54 = arith.constant dense<0.000000e+00> : vector<8x64xf32>
    %96 = tpu.matmul %93, %95, %cst_54 {dimension_numbers = #tpu.dot_dimension_numbers<[1], [0], [0], [1], [0, 0, 1, 1], [], []>} : vector<8x64xf32>, vector<64x64xf32>, vector<8x64xf32> -> vector<8x64xf32>
    %97 = arith.addf %90, %96 : vector<8x64xf32>
    %c2_55 = arith.constant 2 : index
    %c0_56 = arith.constant 0 : index
    %c0_57 = arith.constant 0 : index
    %98 = vector.load %arg6[%c2_55, %c0_56, %c0_57] : memref<4x8x16xf32, #tpu.memory_space<vmem>>, vector<1x8x16xf32>
    %99 = vector.shape_cast %98 : vector<1x8x16xf32> to vector<8x16xf32>
    %cst_58 = arith.constant dense<0.000000e+00> : vector<8x64xf32>
    %100 = tpu.matmul %99, %84, %cst_58 {dimension_numbers = #tpu.dot_dimension_numbers<[1], [0], [0], [1], [0, 0, 1, 1], [], []>} : vector<8x16xf32>, vector<16x64xf32>, vector<8x64xf32> -> vector<8x64xf32>
    %c2_59 = arith.constant 2 : index
    %c0_60 = arith.constant 0 : index
    %c0_61 = arith.constant 0 : index
    %101 = vector.load %arg7[%c2_59, %c0_60, %c0_61] : memref<4x64x64xf32, #tpu.memory_space<vmem>>, vector<1x64x64xf32>
    %102 = vector.shape_cast %101 : vector<1x64x64xf32> to vector<64x64xf32>
    %cst_62 = arith.constant dense<0.000000e+00> : vector<8x64xf32>
    %103 = tpu.matmul %100, %102, %cst_62 {dimension_numbers = #tpu.dot_dimension_numbers<[1], [0], [0], [1], [0, 0, 1, 1], [], []>} : vector<8x64xf32>, vector<64x64xf32>, vector<8x64xf32> -> vector<8x64xf32>
    %104 = arith.addf %97, %103 : vector<8x64xf32>
    %c3_63 = arith.constant 3 : index
    %c0_64 = arith.constant 0 : index
    %c0_65 = arith.constant 0 : index
    %105 = vector.load %arg6[%c3_63, %c0_64, %c0_65] : memref<4x8x16xf32, #tpu.memory_space<vmem>>, vector<1x8x16xf32>
    %106 = vector.shape_cast %105 : vector<1x8x16xf32> to vector<8x16xf32>
    %cst_66 = arith.constant dense<0.000000e+00> : vector<8x64xf32>
    %107 = tpu.matmul %106, %84, %cst_66 {dimension_numbers = #tpu.dot_dimension_numbers<[1], [0], [0], [1], [0, 0, 1, 1], [], []>} : vector<8x16xf32>, vector<16x64xf32>, vector<8x64xf32> -> vector<8x64xf32>
    %c3_67 = arith.constant 3 : index
    %c0_68 = arith.constant 0 : index
    %c0_69 = arith.constant 0 : index
    %108 = vector.load %arg7[%c3_67, %c0_68, %c0_69] : memref<4x64x64xf32, #tpu.memory_space<vmem>>, vector<1x64x64xf32>
    %109 = vector.shape_cast %108 : vector<1x64x64xf32> to vector<64x64xf32>
    %cst_70 = arith.constant dense<0.000000e+00> : vector<8x64xf32>
    %110 = tpu.matmul %107, %109, %cst_70 {dimension_numbers = #tpu.dot_dimension_numbers<[1], [0], [0], [1], [0, 0, 1, 1], [], []>} : vector<8x64xf32>, vector<64x64xf32>, vector<8x64xf32> -> vector<8x64xf32>
    %111 = arith.addf %104, %110 : vector<8x64xf32>
    %cst_71 = arith.constant dense<0.000000e+00> : vector<64xf32>
    %112 = vector.multi_reduction <add>, %111, %cst_71 [0] : vector<8x64xf32> to vector<64xf32>
    %113 = vector.shape_cast %112 : vector<64xf32> to vector<1x64xf32>
    %114 = arith.mulf %111, %111 : vector<8x64xf32>
    %cst_72 = arith.constant dense<0.000000e+00> : vector<64xf32>
    %115 = vector.multi_reduction <add>, %114, %cst_72 [0] : vector<8x64xf32> to vector<64xf32>
    %116 = vector.shape_cast %115 : vector<64xf32> to vector<1x64xf32>
    %117 = vector.extract_strided_slice %113 {offsets = [0, 0], sizes = [1, 16], strides = [1, 1]} : vector<1x64xf32> to vector<1x16xf32>
    %118 = vector.extract_strided_slice %116 {offsets = [0, 0], sizes = [1, 16], strides = [1, 1]} : vector<1x64xf32> to vector<1x16xf32>
    %119 = vector.extract_strided_slice %113 {offsets = [0, 16], sizes = [1, 16], strides = [1, 1]} : vector<1x64xf32> to vector<1x16xf32>
    %120 = arith.addf %117, %119 : vector<1x16xf32>
    %121 = vector.extract_strided_slice %116 {offsets = [0, 16], sizes = [1, 16], strides = [1, 1]} : vector<1x64xf32> to vector<1x16xf32>
    %122 = arith.addf %118, %121 : vector<1x16xf32>
    %123 = vector.extract_strided_slice %113 {offsets = [0, 32], sizes = [1, 16], strides = [1, 1]} : vector<1x64xf32> to vector<1x16xf32>
    %124 = arith.addf %120, %123 : vector<1x16xf32>
    %125 = vector.extract_strided_slice %116 {offsets = [0, 32], sizes = [1, 16], strides = [1, 1]} : vector<1x64xf32> to vector<1x16xf32>
    %126 = arith.addf %122, %125 : vector<1x16xf32>
    %127 = vector.extract_strided_slice %113 {offsets = [0, 48], sizes = [1, 16], strides = [1, 1]} : vector<1x64xf32> to vector<1x16xf32>
    %128 = arith.addf %124, %127 : vector<1x16xf32>
    %129 = vector.extract_strided_slice %116 {offsets = [0, 48], sizes = [1, 16], strides = [1, 1]} : vector<1x64xf32> to vector<1x16xf32>
    %130 = arith.addf %126, %129 : vector<1x16xf32>
    %cst_73 = arith.constant 3.125000e-02 : f32
    %131 = vector.broadcast %cst_73 : f32 to vector<1x16xf32>
    %132 = arith.mulf %128, %131 : vector<1x16xf32>
    %cst_74 = arith.constant 3.125000e-02 : f32
    %133 = vector.broadcast %cst_74 : f32 to vector<1x16xf32>
    %134 = arith.mulf %130, %133 : vector<1x16xf32>
    %135 = arith.mulf %132, %132 : vector<1x16xf32>
    %136 = arith.subf %134, %135 : vector<1x16xf32>
    %c0_75 = arith.constant 0 : index
    %c0_76 = arith.constant 0 : index
    %137 = vector.load %arg8[%c0_75, %c0_76] : memref<1x16xf32, #tpu.memory_space<vmem>>, vector<1x16xf32>
    %cst_77 = arith.constant 9.99999974E-6 : f32
    %138 = vector.broadcast %cst_77 : f32 to vector<1x16xf32>
    %139 = arith.addf %136, %138 : vector<1x16xf32>
    %140 = math.rsqrt %139 : vector<1x16xf32>
    %141 = arith.mulf %137, %140 : vector<1x16xf32>
    %c0_78 = arith.constant 0 : index
    %c0_79 = arith.constant 0 : index
    %142 = vector.load %arg9[%c0_78, %c0_79] : memref<1x16xf32, #tpu.memory_space<vmem>>, vector<1x16xf32>
    %143 = arith.mulf %132, %141 : vector<1x16xf32>
    %144 = arith.subf %142, %143 : vector<1x16xf32>
    %145 = tpu.concatenate %141, %141, %141, %141 in 1 : vector<1x16xf32>, vector<1x16xf32>, vector<1x16xf32>, vector<1x16xf32> -> vector<1x64xf32>
    %146 = tpu.concatenate %144, %144, %144, %144 in 1 : vector<1x16xf32>, vector<1x16xf32>, vector<1x16xf32>, vector<1x16xf32> -> vector<1x64xf32>
    %147 = vector.broadcast %145 : vector<1x64xf32> to vector<8x64xf32>
    %148 = arith.mulf %111, %147 : vector<8x64xf32>
    %149 = vector.broadcast %146 : vector<1x64xf32> to vector<8x64xf32>
    %150 = arith.addf %148, %149 : vector<8x64xf32>
    %cst_80 = arith.constant 0.000000e+00 : f32
    %151 = vector.broadcast %cst_80 : f32 to vector<8x64xf32>
    %152 = arith.maximumf %150, %151 : vector<8x64xf32>
    %c0_81 = arith.constant 0 : index
    %c0_82 = arith.constant 0 : index
    %c0_83 = arith.constant 0 : index
    %153 = vector.load %arg10[%c0_81, %c0_82, %c0_83] : memref<4x4x8xf32, #tpu.memory_space<vmem>>, vector<1x4x8xf32>
    %154 = vector.shape_cast %153 : vector<1x4x8xf32> to vector<4x8xf32>
    %cst_84 = arith.constant dense<0.000000e+00> : vector<4x64xf32>
    %155 = tpu.matmul %154, %152, %cst_84 {dimension_numbers = #tpu.dot_dimension_numbers<[1], [0], [0], [1], [0, 0, 1, 1], [], []>} : vector<4x8xf32>, vector<8x64xf32>, vector<4x64xf32> -> vector<4x64xf32>
    %c0_85 = arith.constant 0 : index
    %c0_86 = arith.constant 0 : index
    %c0_87 = arith.constant 0 : index
    %156 = vector.load %arg11[%c0_85, %c0_86, %c0_87] : memref<4x64x64xf32, #tpu.memory_space<vmem>>, vector<1x64x64xf32>
    %157 = vector.shape_cast %156 : vector<1x64x64xf32> to vector<64x64xf32>
    %cst_88 = arith.constant dense<0.000000e+00> : vector<4x64xf32>
    %158 = tpu.matmul %155, %157, %cst_88 {dimension_numbers = #tpu.dot_dimension_numbers<[1], [0], [0], [1], [0, 0, 1, 1], [], []>} : vector<4x64xf32>, vector<64x64xf32>, vector<4x64xf32> -> vector<4x64xf32>
    %c1_89 = arith.constant 1 : index
    %c0_90 = arith.constant 0 : index
    %c0_91 = arith.constant 0 : index
    %159 = vector.load %arg10[%c1_89, %c0_90, %c0_91] : memref<4x4x8xf32, #tpu.memory_space<vmem>>, vector<1x4x8xf32>
    %160 = vector.shape_cast %159 : vector<1x4x8xf32> to vector<4x8xf32>
    %cst_92 = arith.constant dense<0.000000e+00> : vector<4x64xf32>
    %161 = tpu.matmul %160, %152, %cst_92 {dimension_numbers = #tpu.dot_dimension_numbers<[1], [0], [0], [1], [0, 0, 1, 1], [], []>} : vector<4x8xf32>, vector<8x64xf32>, vector<4x64xf32> -> vector<4x64xf32>
    %c1_93 = arith.constant 1 : index
    %c0_94 = arith.constant 0 : index
    %c0_95 = arith.constant 0 : index
    %162 = vector.load %arg11[%c1_93, %c0_94, %c0_95] : memref<4x64x64xf32, #tpu.memory_space<vmem>>, vector<1x64x64xf32>
    %163 = vector.shape_cast %162 : vector<1x64x64xf32> to vector<64x64xf32>
    %cst_96 = arith.constant dense<0.000000e+00> : vector<4x64xf32>
    %164 = tpu.matmul %161, %163, %cst_96 {dimension_numbers = #tpu.dot_dimension_numbers<[1], [0], [0], [1], [0, 0, 1, 1], [], []>} : vector<4x64xf32>, vector<64x64xf32>, vector<4x64xf32> -> vector<4x64xf32>
    %165 = arith.addf %158, %164 : vector<4x64xf32>
    %c2_97 = arith.constant 2 : index
    %c0_98 = arith.constant 0 : index
    %c0_99 = arith.constant 0 : index
    %166 = vector.load %arg10[%c2_97, %c0_98, %c0_99] : memref<4x4x8xf32, #tpu.memory_space<vmem>>, vector<1x4x8xf32>
    %167 = vector.shape_cast %166 : vector<1x4x8xf32> to vector<4x8xf32>
    %cst_100 = arith.constant dense<0.000000e+00> : vector<4x64xf32>
    %168 = tpu.matmul %167, %152, %cst_100 {dimension_numbers = #tpu.dot_dimension_numbers<[1], [0], [0], [1], [0, 0, 1, 1], [], []>} : vector<4x8xf32>, vector<8x64xf32>, vector<4x64xf32> -> vector<4x64xf32>
    %c2_101 = arith.constant 2 : index
    %c0_102 = arith.constant 0 : index
    %c0_103 = arith.constant 0 : index
    %169 = vector.load %arg11[%c2_101, %c0_102, %c0_103] : memref<4x64x64xf32, #tpu.memory_space<vmem>>, vector<1x64x64xf32>
    %170 = vector.shape_cast %169 : vector<1x64x64xf32> to vector<64x64xf32>
    %cst_104 = arith.constant dense<0.000000e+00> : vector<4x64xf32>
    %171 = tpu.matmul %168, %170, %cst_104 {dimension_numbers = #tpu.dot_dimension_numbers<[1], [0], [0], [1], [0, 0, 1, 1], [], []>} : vector<4x64xf32>, vector<64x64xf32>, vector<4x64xf32> -> vector<4x64xf32>
    %172 = arith.addf %165, %171 : vector<4x64xf32>
    %c3_105 = arith.constant 3 : index
    %c0_106 = arith.constant 0 : index
    %c0_107 = arith.constant 0 : index
    %173 = vector.load %arg10[%c3_105, %c0_106, %c0_107] : memref<4x4x8xf32, #tpu.memory_space<vmem>>, vector<1x4x8xf32>
    %174 = vector.shape_cast %173 : vector<1x4x8xf32> to vector<4x8xf32>
    %cst_108 = arith.constant dense<0.000000e+00> : vector<4x64xf32>
    %175 = tpu.matmul %174, %152, %cst_108 {dimension_numbers = #tpu.dot_dimension_numbers<[1], [0], [0], [1], [0, 0, 1, 1], [], []>} : vector<4x8xf32>, vector<8x64xf32>, vector<4x64xf32> -> vector<4x64xf32>
    %c3_109 = arith.constant 3 : index
    %c0_110 = arith.constant 0 : index
    %c0_111 = arith.constant 0 : index
    %176 = vector.load %arg11[%c3_109, %c0_110, %c0_111] : memref<4x64x64xf32, #tpu.memory_space<vmem>>, vector<1x64x64xf32>
    %177 = vector.shape_cast %176 : vector<1x64x64xf32> to vector<64x64xf32>
    %cst_112 = arith.constant dense<0.000000e+00> : vector<4x64xf32>
    %178 = tpu.matmul %175, %177, %cst_112 {dimension_numbers = #tpu.dot_dimension_numbers<[1], [0], [0], [1], [0, 0, 1, 1], [], []>} : vector<4x64xf32>, vector<64x64xf32>, vector<4x64xf32> -> vector<4x64xf32>
    %179 = arith.addf %172, %178 : vector<4x64xf32>
    %cst_113 = arith.constant dense<0.000000e+00> : vector<64xf32>
    %180 = vector.multi_reduction <add>, %179, %cst_113 [0] : vector<4x64xf32> to vector<64xf32>
    %181 = vector.shape_cast %180 : vector<64xf32> to vector<1x64xf32>
    %182 = arith.mulf %179, %179 : vector<4x64xf32>
    %cst_114 = arith.constant dense<0.000000e+00> : vector<64xf32>
    %183 = vector.multi_reduction <add>, %182, %cst_114 [0] : vector<4x64xf32> to vector<64xf32>
    %184 = vector.shape_cast %183 : vector<64xf32> to vector<1x64xf32>
    %185 = vector.extract_strided_slice %181 {offsets = [0, 0], sizes = [1, 32], strides = [1, 1]} : vector<1x64xf32> to vector<1x32xf32>
    %186 = vector.extract_strided_slice %184 {offsets = [0, 0], sizes = [1, 32], strides = [1, 1]} : vector<1x64xf32> to vector<1x32xf32>
    %187 = vector.extract_strided_slice %181 {offsets = [0, 32], sizes = [1, 32], strides = [1, 1]} : vector<1x64xf32> to vector<1x32xf32>
    %188 = arith.addf %185, %187 : vector<1x32xf32>
    %189 = vector.extract_strided_slice %184 {offsets = [0, 32], sizes = [1, 32], strides = [1, 1]} : vector<1x64xf32> to vector<1x32xf32>
    %190 = arith.addf %186, %189 : vector<1x32xf32>
    %cst_115 = arith.constant 1.250000e-01 : f32
    %191 = vector.broadcast %cst_115 : f32 to vector<1x32xf32>
    %192 = arith.mulf %188, %191 : vector<1x32xf32>
    %cst_116 = arith.constant 1.250000e-01 : f32
    %193 = vector.broadcast %cst_116 : f32 to vector<1x32xf32>
    %194 = arith.mulf %190, %193 : vector<1x32xf32>
    %195 = arith.mulf %192, %192 : vector<1x32xf32>
    %196 = arith.subf %194, %195 : vector<1x32xf32>
    %c0_117 = arith.constant 0 : index
    %c0_118 = arith.constant 0 : index
    %197 = vector.load %arg12[%c0_117, %c0_118] : memref<1x32xf32, #tpu.memory_space<vmem>>, vector<1x32xf32>
    %cst_119 = arith.constant 9.99999974E-6 : f32
    %198 = vector.broadcast %cst_119 : f32 to vector<1x32xf32>
    %199 = arith.addf %196, %198 : vector<1x32xf32>
    %200 = math.rsqrt %199 : vector<1x32xf32>
    %201 = arith.mulf %197, %200 : vector<1x32xf32>
    %c0_120 = arith.constant 0 : index
    %c0_121 = arith.constant 0 : index
    %202 = vector.load %arg13[%c0_120, %c0_121] : memref<1x32xf32, #tpu.memory_space<vmem>>, vector<1x32xf32>
    %203 = arith.mulf %192, %201 : vector<1x32xf32>
    %204 = arith.subf %202, %203 : vector<1x32xf32>
    %205 = tpu.concatenate %201, %201 in 1 : vector<1x32xf32>, vector<1x32xf32> -> vector<1x64xf32>
    %206 = tpu.concatenate %204, %204 in 1 : vector<1x32xf32>, vector<1x32xf32> -> vector<1x64xf32>
    %207 = vector.broadcast %205 : vector<1x64xf32> to vector<4x64xf32>
    %208 = arith.mulf %179, %207 : vector<4x64xf32>
    %209 = vector.broadcast %206 : vector<1x64xf32> to vector<4x64xf32>
    %210 = arith.addf %208, %209 : vector<4x64xf32>
    %cst_122 = arith.constant 0.000000e+00 : f32
    %211 = vector.broadcast %cst_122 : f32 to vector<4x64xf32>
    %212 = arith.maximumf %210, %211 : vector<4x64xf32>
    %c0_123 = arith.constant 0 : index
    %c0_124 = arith.constant 0 : index
    %213 = vector.load %arg14[%c0_123, %c0_124] : memref<4x64xf32, #tpu.memory_space<vmem>>, vector<4x64xf32>
    tpu.vector_store %arg14[%c0_123, %c0_124], %212 {strides = array<i32>} : memref<4x64xf32, #tpu.memory_space<vmem>>, vector<4x64xf32>,
    return
  }
  func.func @transform_0(%arg0: i32) -> (i32, i32) {
    %c0_i32 = arith.constant 0 : i32
    %c0_i32_0 = arith.constant 0 : i32
    %c0_i32_1 = arith.constant 0 : i32
    return %c0_i32, %c0_i32_0 : i32, i32
  }
  func.func @transform_1(%arg0: i32) -> (i32, i32, i32) {
    %c0_i32 = arith.constant 0 : i32
    %c0_i32_0 = arith.constant 0 : i32
    %c0_i32_1 = arith.constant 0 : i32
    %c0_i32_2 = arith.constant 0 : i32
    return %c0_i32, %c0_i32_0, %c0_i32_1 : i32, i32, i32
  }
  func.func @transform_2(%arg0: i32) -> (i32, i32, i32) {
    %c0_i32 = arith.constant 0 : i32
    %c0_i32_0 = arith.constant 0 : i32
    %c0_i32_1 = arith.constant 0 : i32
    %c0_i32_2 = arith.constant 0 : i32
    return %c0_i32, %c0_i32_0, %c0_i32_1 : i32, i32, i32
  }
  func.func @transform_3(%arg0: i32) -> (i32, i32) {
    %c0_i32 = arith.constant 0 : i32
    %c0_i32_0 = arith.constant 0 : i32
    %c0_i32_1 = arith.constant 0 : i32
    return %c0_i32, %c0_i32_0 : i32, i32
  }
  func.func @transform_4(%arg0: i32) -> (i32, i32) {
    %c0_i32 = arith.constant 0 : i32
    %c0_i32_0 = arith.constant 0 : i32
    %c0_i32_1 = arith.constant 0 : i32
    return %c0_i32, %c0_i32_0 : i32, i32
  }
  func.func @transform_5(%arg0: i32) -> (i32, i32, i32) {
    %c0_i32 = arith.constant 0 : i32
    %c0_i32_0 = arith.constant 0 : i32
    %c0_i32_1 = arith.constant 0 : i32
    %c0_i32_2 = arith.constant 0 : i32
    return %c0_i32, %c0_i32_0, %c0_i32_1 : i32, i32, i32
  }
  func.func @transform_6(%arg0: i32) -> (i32, i32, i32) {
    %c0_i32 = arith.constant 0 : i32
    %c0_i32_0 = arith.constant 0 : i32
    %c0_i32_1 = arith.constant 0 : i32
    %c0_i32_2 = arith.constant 0 : i32
    return %c0_i32, %c0_i32_0, %c0_i32_1 : i32, i32, i32
  }
  func.func @transform_7(%arg0: i32) -> (i32, i32) {
    %c0_i32 = arith.constant 0 : i32
    %c0_i32_0 = arith.constant 0 : i32
    %c0_i32_1 = arith.constant 0 : i32
    return %c0_i32, %c0_i32_0 : i32, i32
  }
  func.func @transform_8(%arg0: i32) -> (i32, i32) {
    %c0_i32 = arith.constant 0 : i32
    %c0_i32_0 = arith.constant 0 : i32
    %c0_i32_1 = arith.constant 0 : i32
    return %c0_i32, %c0_i32_0 : i32, i32
  }
  func.func @transform_9(%arg0: i32) -> (i32, i32, i32) {
    %c0_i32 = arith.constant 0 : i32
    %c0_i32_0 = arith.constant 0 : i32
    %c0_i32_1 = arith.constant 0 : i32
    %c0_i32_2 = arith.constant 0 : i32
    return %c0_i32, %c0_i32_0, %c0_i32_1 : i32, i32, i32
  }
  func.func @transform_10(%arg0: i32) -> (i32, i32, i32) {
    %c0_i32 = arith.constant 0 : i32
    %c0_i32_0 = arith.constant 0 : i32
    %c0_i32_1 = arith.constant 0 : i32
    %c0_i32_2 = arith.constant 0 : i32
    return %c0_i32, %c0_i32_0, %c0_i32_1 : i32, i32, i32
  }
  func.func @transform_11(%arg0: i32) -> (i32, i32) {
    %c0_i32 = arith.constant 0 : i32
    %c0_i32_0 = arith.constant 0 : i32
    %c0_i32_1 = arith.constant 0 : i32
    return %c0_i32, %c0_i32_0 : i32, i32
  }
  func.func @transform_12(%arg0: i32) -> (i32, i32) {
    %c0_i32 = arith.constant 0 : i32
    %c0_i32_0 = arith.constant 0 : i32
    %c0_i32_1 = arith.constant 0 : i32
    return %c0_i32, %c0_i32_0 : i32, i32
  }
  func.func @transform_13(%arg0: i32) -> (i32, i32) {
    %c0_i32 = arith.constant 0 : i32
    %c0_i32_0 = arith.constant 0 : i32
    %c0_i32_1 = arith.constant 0 : i32
    return %c0_i32, %c0_i32_0 : i32, i32
  }
}

</mosaic_0001>

<llo_original>
// kernel: forward.1
$region0: #{forward.1}
  #allocation0 [shape = 'u32[]', space=smem, size = 0x4, offset = 0x4, fixed_abs, tag = 'smem constant byte address 0x4 - core index']
  #allocation1 [shape = 'u32[144,128]{1,0:T(1,128)}', space=vmem, size = 0x12000, scoped, tag = 'internal scratch']
  %s0 = inlined_call_operand.vmem [shape: f32[32,64], index: 0, kind: input, shape index: {}]
  %s1 = inlined_call_operand.hbm [shape: f32[4,16,32], index: 1, kind: input, shape index: {}]
  %s2 = inlined_call_operand.vmem [shape: f32[4,64,64], index: 2, kind: input, shape index: {}]
  %s3 = inlined_call_operand.vmem [shape: f32[1,8], index: 3, kind: input, shape index: {}]
  %s4 = inlined_call_operand.vmem [shape: f32[1,8], index: 4, kind: input, shape index: {}]
  %s5 = inlined_call_operand.vmem [shape: f32[4,8,16], index: 5, kind: input, shape index: {}]
  %s6 = inlined_call_operand.vmem [shape: f32[4,64,64], index: 6, kind: input, shape index: {}]
  %s7 = inlined_call_operand.vmem [shape: f32[1,16], index: 7, kind: input, shape index: {}]
  %s8 = inlined_call_operand.vmem [shape: f32[1,16], index: 8, kind: input, shape index: {}]
  %s9 = inlined_call_operand.vmem [shape: f32[4,4,8], index: 9, kind: input, shape index: {}]
  %s10 = inlined_call_operand.hbm [shape: f32[4,64,64], index: 10, kind: input, shape index: {}]
  %s11 = inlined_call_operand.vmem [shape: f32[1,32], index: 11, kind: input, shape index: {}]
  %s12 = inlined_call_operand.vmem [shape: f32[1,32], index: 12, kind: input, shape index: {}]
  %s13 = inlined_call_operand.vmem [shape: f32[4,64], index: 13, kind: output, shape index: {}]
  %s14 = sld [smem:[#allocation0]]
  $region70: #{forward.1} parent=0
    _
  %s16 = ssub.s32 1, %s14
  %s17 = scalar_select 0, %s16, %s14
  $region1: #{forward.1} parent=0
    #allocation2 [shape = 'u8[32768]{0}', space=vmem, size = 0x8000, scoped, tag = 'input window, operand 1, single buffered']
    #allocation3 [shape = 's32[1]{0}', space=sflag, size = 0x4, scoped, tag = 'scoped memory for forward.1']
    #allocation4 [shape = 'u8[131072]{0}', space=vmem, size = 0x20000, scoped, tag = 'input window, operand 10, single buffered']
    #allocation5 [shape = 's32[1]{0}', space=sflag, size = 0x4, scoped, tag = 'scoped memory for forward.1']
    %18 = vsyncpa [#allocation3], 0
    %19 = vsyncpa [#allocation5], 0
    // Predicated region
    $region2: #{forward.1} parent=1 // pred_check
      _
    $region3: #{forward.1} parent=1 // pred_check_branch
      %21 = sbr.rel (0) target = $region5
    $region4: #{forward.1} parent=1 // pred_region
      _
    $region5: #{forward.1} parent=1 // pred_fallthru
      _
    // Predicated region
    $region6: #{forward.1} parent=1 // pred_check
      _
    $region7: #{forward.1} parent=1 // pred_check_branch
      %23 = sbr.rel (0) target = $region9
    $region8: #{forward.1} parent=1 // pred_region
      %s25 = ssub.s32 1024, 1024
      %26 = vsyncadd [#allocation3], %s25
      %s27 = sshll.u32 [#allocation2], 4
      %s28 = int_to_ptr.vmem [resolvable:$true] %s27
      %33 = dma.hbm_to_vmem [thread:$0]  %s1, 1024, %s28, [#allocation3], 128, 128, 8
    $region9: #{forward.1} parent=1 // pred_fallthru
      _
    // Predicated region
    $region10: #{forward.1} parent=1 // pred_check
      _
    $region11: #{forward.1} parent=1 // pred_check_branch
      %35 = sbr.rel (0) target = $region13
    $region12: #{forward.1} parent=1 // pred_region
      _
    $region13: #{forward.1} parent=1 // pred_fallthru
      _
    // Predicated region
    $region14: #{forward.1} parent=1 // pred_check
      _
    $region15: #{forward.1} parent=1 // pred_check_branch
      %37 = sbr.rel (0) target = $region17
    $region16: #{forward.1} parent=1 // pred_region
      _
    $region17: #{forward.1} parent=1 // pred_fallthru
      _
    // Predicated region
    $region18: #{forward.1} parent=1 // pred_check
      _
    $region19: #{forward.1} parent=1 // pred_check_branch
      %39 = sbr.rel (0) target = $region21
    $region20: #{forward.1} parent=1 // pred_region
      _
    $region21: #{forward.1} parent=1 // pred_fallthru
      _
    // Predicated region
    $region22: #{forward.1} parent=1 // pred_check
      _
    $region23: #{forward.1} parent=1 // pred_check_branch
      %41 = sbr.rel (0) target = $region25
    $region24: #{forward.1} parent=1 // pred_region
      _
    $region25: #{forward.1} parent=1 // pred_fallthru
      _
    // Predicated region
    $region26: #{forward.1} parent=1 // pred_check
      _
    $region27: #{forward.1} parent=1 // pred_check_branch
      %43 = sbr.rel (0) target = $region29
    $region28: #{forward.1} parent=1 // pred_region
      _
    $region29: #{forward.1} parent=1 // pred_fallthru
      _
    // Predicated region
    $region30: #{forward.1} parent=1 // pred_check
      _
    $region31: #{forward.1} parent=1 // pred_check_branch
      %45 = sbr.rel (0) target = $region33
    $region32: #{forward.1} parent=1 // pred_region
      _
    $region33: #{forward.1} parent=1 // pred_fallthru
      _
    // Predicated region
    $region34: #{forward.1} parent=1 // pred_check
      _
    $region35: #{forward.1} parent=1 // pred_check_branch
      %47 = sbr.rel (0) target = $region37
    $region36: #{forward.1} parent=1 // pred_region
      _
    $region37: #{forward.1} parent=1 // pred_fallthru
      _
    // Predicated region
    $region38: #{forward.1} parent=1 // pred_check
      _
    $region39: #{forward.1} parent=1 // pred_check_branch
      %49 = sbr.rel (0) target = $region41
    $region40: #{forward.1} parent=1 // pred_region
      _
    $region41: #{forward.1} parent=1 // pred_fallthru
      _
    // Predicated region
    $region42: #{forward.1} parent=1 // pred_check
      _
    $region43: #{forward.1} parent=1 // pred_check_branch
      %51 = sbr.rel (0) target = $region45
    $region44: #{forward.1} parent=1 // pred_region
      %s53 = ssub.s32 4096, 4096
      %54 = vsyncadd [#allocation5], %s53
      %s55 = sshll.u32 [#allocation4], 4
      %s56 = int_to_ptr.vmem [resolvable:$true] %s55
      %61 = dma.hbm_to_vmem [thread:$0]  %s10, 4096, %s56, [#allocation5], 128, 128, 8
    $region45: #{forward.1} parent=1 // pred_fallthru
      _
    // Predicated region
    $region46: #{forward.1} parent=1 // pred_check
      _
    $region47: #{forward.1} parent=1 // pred_check_branch
      %63 = sbr.rel (0) target = $region49
    $region48: #{forward.1} parent=1 // pred_region
      _
    $region49: #{forward.1} parent=1 // pred_fallthru
      _
    // Predicated region
    $region50: #{forward.1} parent=1 // pred_check
      _
    $region51: #{forward.1} parent=1 // pred_check_branch
      %65 = sbr.rel (0) target = $region53
    $region52: #{forward.1} parent=1 // pred_region
      _
    $region53: #{forward.1} parent=1 // pred_fallthru
      _
    // Predicated region
    $region54: #{forward.1} parent=1 // pred_check
      _
    $region55: #{forward.1} parent=1 // pred_check_branch
      %67 = sbr.rel (0) target = $region57
    $region56: #{forward.1} parent=1 // pred_region
      %68 = dma.done [#allocation3], 1024
    $region57: #{forward.1} parent=1 // pred_fallthru
      _
    // Predicated region
    $region58: #{forward.1} parent=1 // pred_check
      _
    $region59: #{forward.1} parent=1 // pred_check_branch
      %70 = sbr.rel (0) target = $region61
    $region60: #{forward.1} parent=1 // pred_region
      %71 = dma.done [#allocation5], 4096
    $region61: #{forward.1} parent=1 // pred_fallthru
      _
    %v72 = vld [vmem:[%s0] sm:$0xff]
    %v73 = vld [vmem:[%s0 + $0x8] sm:$0xff]
    %v74 = vld [vmem:[%s0 + $0x10] sm:$0xff]
    %v75 = vld [vmem:[%s0 + $0x18] sm:$0xff]
    %v76 = vld [vmem:[#allocation2] sm:$0xff]
    %v77 = vld [vmem:[#allocation2 + $0x8] sm:$0xff]
    %vm78 = vcmask 261120
    %v80 = vsel %vm78, %v76, 0
    %v83 = vsel %vm78, %v77, 0
    %85 = vmatprep.subr.mxu0 0.0
    %86 = vmatpush1.msra.mxu0 %v72
    %87 = vmatprep.subr.mxu0 0.0
    %88 = vmatpush1.msra.mxu0 %v73
    %89 = vmatprep.subr.mxu0 0.0
    %90 = vmatpush1.msra.mxu0 %v74
    %91 = vmatprep.subr.mxu0 0.0
    %92 = vmatpush1.msra.mxu0 %v75
    %93 = vmatprep.subr.mxu0 0.0
    %94 = vmatpush1.msra.mxu0 0.0
    %95 = vmatprep.subr.mxu0 0.0
    %96 = vmatpush1.msra.mxu0 0.0
    %97 = vmatprep.subr.mxu0 0.0
    %98 = vmatpush1.msra.mxu0 0.0
    %99 = vmatprep.subr.mxu0 0.0
    %100 = vmatpush1.msra.mxu0 0.0
    %101 = vmatprep.subr.mxu0 0.0
    %102 = vmatpush1.msra.mxu0 0.0
    %103 = vmatprep.subr.mxu0 0.0
    %104 = vmatpush1.msra.mxu0 0.0
    %105 = vmatprep.subr.mxu0 0.0
    %106 = vmatpush1.msra.mxu0 0.0
    %107 = vmatprep.subr.mxu0 0.0
    %108 = vmatpush1.msra.mxu0 0.0
    %109 = vmatprep.subr.mxu0 0.0
    %110 = vmatpush1.msra.mxu0 0.0
    %111 = vmatprep.subr.mxu0 0.0
    %112 = vmatpush1.msra.mxu0 0.0
    %113 = vmatprep.subr.mxu0 0.0
    %114 = vmatpush1.msra.mxu0 0.0
    %115 = vmatprep.subr.mxu0 0.0
    %116 = vmatpush1.msra.mxu0 0.0
    %117 = vmatprep.subr.mxu0 0.0
    %118 = vmatpush1.msra.mxu0 0.0
    %119 = vmatprep.subr.mxu0 0.0
    %120 = vmatpush1.msra.mxu0 0.0
    %121 = vmatprep.subr.mxu0 0.0
    %122 = vmatpush1.msra.mxu0 0.0
    %123 = vmatprep.subr.mxu0 0.0
    %124 = vmatpush1.msra.mxu0 0.0
    %125 = vmatprep.subr.mxu0 0.0
    %126 = vmatpush1.msra.mxu0 0.0
    %127 = vmatprep.subr.mxu0 0.0
    %128 = vmatpush1.msra.mxu0 0.0
    %129 = vmatprep.subr.mxu0 0.0
    %130 = vmatpush1.msra.mxu0 0.0
    %131 = vmatprep.subr.mxu0 0.0
    %132 = vmatpush1.msra.mxu0 0.0
    %133 = vmatprep.subr.mxu0 0.0
    %134 = vmatpush1.msra.mxu0 0.0
    %135 = vmatprep.subr.mxu0 0.0
    %136 = vmatpush1.msra.mxu0 0.0
    %137 = vmatprep.subr.mxu0 0.0
    %138 = vmatpush1.msra.mxu0 0.0
    %139 = vmatprep.subr.mxu0 0.0
    %140 = vmatpush1.msra.mxu0 0.0
    %141 = vmatprep.subr.mxu0 0.0
    %142 = vmatpush1.msra.mxu0 0.0
    %143 = vmatprep.subr.mxu0 0.0
    %144 = vmatpush1.msra.mxu0 0.0
    %145 = vmatprep.subr.mxu0 0.0
    %146 = vmatpush1.msra.mxu0 0.0
    %147 = vmatprep.subr.mxu0 0.0
    %148 = vmatpush1.msra.mxu0 0.0
    %149 = vmatprep.mubr.f32.mxu0 0.0
    %150 = vmatmul.mubr.f32.gmra.mrb[0].mxu0 %v80
    %v151 = vpop.f32.mrb[0].mxu0
    %v152 = vadd.f32 0.0, %v151
    %v153 = vpop.f32.mrb[0].mxu0
    %154 = vmatprep.mubr.f32.mxu0 0.0
    %155 = vmatmul.mubr.f32.gmra.mrb[0].mxu0 %v83
    %v156 = vpop.f32.mrb[0].mxu0
    %v157 = vadd.f32 0.0, %v156
    %v158 = vpop.f32.mrb[0].mxu0
    %159 = vdwg.mxu0
    %v160 = vld [vmem:[%s2] sm:$0xff]
    %v161 = vld [vmem:[%s2 + $0x8] sm:$0xff]
    %v162 = vld [vmem:[%s2 + $0x10] sm:$0xff]
    %v163 = vld [vmem:[%s2 + $0x18] sm:$0xff]
    %v164 = vld [vmem:[%s2 + $0x20] sm:$0xff]
    %v165 = vld [vmem:[%s2 + $0x28] sm:$0xff]
    %v166 = vld [vmem:[%s2 + $0x30] sm:$0xff]
    %v167 = vld [vmem:[%s2 + $0x38] sm:$0xff]
    %s168 = scalar_lea.vmem [#allocation2], 16
    %v169 = vld [vmem:[%s168] sm:$0xff]
    %v170 = vld [vmem:[%s168 + $0x8] sm:$0xff]
    %v172 = vsel %vm78, %v169, 0
    %v175 = vsel %vm78, %v170, 0
    %177 = vmatprep.subr.mxu0 0.0
    %178 = vmatpush1.msra.mxu0 %v72
    %179 = vmatprep.subr.mxu0 0.0
    %180 = vmatpush1.msra.mxu0 %v73
    %181 = vmatprep.subr.mxu0 0.0
    %182 = vmatpush1.msra.mxu0 %v74
    %183 = vmatprep.subr.mxu0 0.0
    %184 = vmatpush1.msra.mxu0 %v75
    %185 = vmatprep.subr.mxu0 0.0
    %186 = vmatpush1.msra.mxu0 0.0
    %187 = vmatprep.subr.mxu0 0.0
    %188 = vmatpush1.msra.mxu0 0.0
    %189 = vmatprep.subr.mxu0 0.0
    %190 = vmatpush1.msra.mxu0 0.0
    %191 = vmatprep.subr.mxu0 0.0
    %192 = vmatpush1.msra.mxu0 0.0
    %193 = vmatprep.subr.mxu0 0.0
    %194 = vmatpush1.msra.mxu0 0.0
    %195 = vmatprep.subr.mxu0 0.0
    %196 = vmatpush1.msra.mxu0 0.0
    %197 = vmatprep.subr.mxu0 0.0
    %198 = vmatpush1.msra.mxu0 0.0
    %199 = vmatprep.subr.mxu0 0.0
    %200 = vmatpush1.msra.mxu0 0.0
    %201 = vmatprep.subr.mxu0 0.0
    %202 = vmatpush1.msra.mxu0 0.0
    %203 = vmatprep.subr.mxu0 0.0
    %204 = vmatpush1.msra.mxu0 0.0
    %205 = vmatprep.subr.mxu0 0.0
    %206 = vmatpush1.msra.mxu0 0.0
    %207 = vmatprep.subr.mxu0 0.0
    %208 = vmatpush1.msra.mxu0 0.0
    %209 = vmatprep.subr.mxu0 0.0
    %210 = vmatpush1.msra.mxu0 0.0
    %211 = vmatprep.subr.mxu0 0.0
    %212 = vmatpush1.msra.mxu0 0.0
    %213 = vmatprep.subr.mxu0 0.0
    %214 = vmatpush1.msra.mxu0 0.0
    %215 = vmatprep.subr.mxu0 0.0
    %216 = vmatpush1.msra.mxu0 0.0
    %217 = vmatprep.subr.mxu0 0.0
    %218 = vmatpush1.msra.mxu0 0.0
    %219 = vmatprep.subr.mxu0 0.0
    %220 = vmatpush1.msra.mxu0 0.0
    %221 = vmatprep.subr.mxu0 0.0
    %222 = vmatpush1.msra.mxu0 0.0
    %223 = vmatprep.subr.mxu0 0.0
    %224 = vmatpush1.msra.mxu0 0.0
    %225 = vmatprep.subr.mxu0 0.0
    %226 = vmatpush1.msra.mxu0 0.0
    %227 = vmatprep.subr.mxu0 0.0
    %228 = vmatpush1.msra.mxu0 0.0
    %229 = vmatprep.subr.mxu0 0.0
    %230 = vmatpush1.msra.mxu0 0.0
    %231 = vmatprep.subr.mxu0 0.0
    %232 = vmatpush1.msra.mxu0 0.0
    %233 = vmatprep.subr.mxu0 0.0
    %234 = vmatpush1.msra.mxu0 0.0
    %235 = vmatprep.subr.mxu0 0.0
    %236 = vmatpush1.msra.mxu0 0.0
    %237 = vmatprep.subr.mxu0 0.0
    %238 = vmatpush1.msra.mxu0 0.0
    %239 = vmatprep.subr.mxu0 0.0
    %240 = vmatpush1.msra.mxu0 0.0
    %241 = vmatprep.mubr.f32.mxu0 0.0
    %242 = vmatmul.mubr.f32.gmra.mrb[0].mxu0 %v172
    %v243 = vpop.f32.mrb[0].mxu0
    %v244 = vadd.f32 0.0, %v243
    %v245 = vpop.f32.mrb[0].mxu0
    %246 = vmatprep.mubr.f32.mxu0 0.0
    %247 = vmatmul.mubr.f32.gmra.mrb[0].mxu0 %v175
    %v248 = vpop.f32.mrb[0].mxu0
    %v249 = vadd.f32 0.0, %v248
    %v250 = vpop.f32.mrb[0].mxu0
    %251 = vdwg.mxu0
    %s252 = scalar_lea.vmem %s2, 64
    %v253 = vld [vmem:[%s252] sm:$0xff]
    %v254 = vld [vmem:[%s252 + $0x8] sm:$0xff]
    %v255 = vld [vmem:[%s252 + $0x10] sm:$0xff]
    %v256 = vld [vmem:[%s252 + $0x18] sm:$0xff]
    %v257 = vld [vmem:[%s252 + $0x20] sm:$0xff]
    %v258 = vld [vmem:[%s252 + $0x28] sm:$0xff]
    %v259 = vld [vmem:[%s252 + $0x30] sm:$0xff]
    %v260 = vld [vmem:[%s252 + $0x38] sm:$0xff]
    %vm261 = vcmask 523264
    %v263 = vsel %vm261, %v244, 0
    %v266 = vsel %vm261, %v249, 0
    %268 = vmatprep.subr.mxu0 0.0
    %269 = vmatpush1.msra.mxu0 %v253
    %270 = vmatprep.subr.mxu0 0.0
    %271 = vmatpush1.msra.mxu0 %v254
    %272 = vmatprep.subr.mxu0 0.0
    %273 = vmatpush1.msra.mxu0 %v255
    %274 = vmatprep.subr.mxu0 0.0
    %275 = vmatpush1.msra.mxu0 %v256
    %276 = vmatprep.subr.mxu0 0.0
    %277 = vmatpush1.msra.mxu0 %v257
    %278 = vmatprep.subr.mxu0 0.0
    %279 = vmatpush1.msra.mxu0 %v258
    %280 = vmatprep.subr.mxu0 0.0
    %281 = vmatpush1.msra.mxu0 %v259
    %282 = vmatprep.subr.mxu0 0.0
    %283 = vmatpush1.msra.mxu0 %v260
    %284 = vmatprep.subr.mxu0 0.0
    %285 = vmatpush1.msra.mxu0 0.0
    %286 = vmatprep.subr.mxu0 0.0
    %287 = vmatpush1.msra.mxu0 0.0
    %288 = vmatprep.subr.mxu0 0.0
    %289 = vmatpush1.msra.mxu0 0.0
    %290 = vmatprep.subr.mxu0 0.0
    %291 = vmatpush1.msra.mxu0 0.0
    %292 = vmatprep.subr.mxu0 0.0
    %293 = vmatpush1.msra.mxu0 0.0
    %294 = vmatprep.subr.mxu0 0.0
    %295 = vmatpush1.msra.mxu0 0.0
    %296 = vmatprep.subr.mxu0 0.0
    %297 = vmatpush1.msra.mxu0 0.0
    %298 = vmatprep.subr.mxu0 0.0
    %299 = vmatpush1.msra.mxu0 0.0
    %300 = vmatprep.subr.mxu0 0.0
    %301 = vmatpush1.msra.mxu0 0.0
    %302 = vmatprep.subr.mxu0 0.0
    %303 = vmatpush1.msra.mxu0 0.0
    %304 = vmatprep.subr.mxu0 0.0
    %305 = vmatpush1.msra.mxu0 0.0
    %306 = vmatprep.subr.mxu0 0.0
    %307 = vmatpush1.msra.mxu0 0.0
    %308 = vmatprep.subr.mxu0 0.0
    %309 = vmatpush1.msra.mxu0 0.0
    %310 = vmatprep.subr.mxu0 0.0
    %311 = vmatpush1.msra.mxu0 0.0
    %312 = vmatprep.subr.mxu0 0.0
    %313 = vmatpush1.msra.mxu0 0.0
    %314 = vmatprep.subr.mxu0 0.0
    %315 = vmatpush1.msra.mxu0 0.0
    %316 = vmatprep.subr.mxu0 0.0
    %317 = vmatpush1.msra.mxu0 0.0
    %318 = vmatprep.subr.mxu0 0.0
    %319 = vmatpush1.msra.mxu0 0.0
    %320 = vmatprep.subr.mxu0 0.0
    %321 = vmatpush1.msra.mxu0 0.0
    %322 = vmatprep.subr.mxu0 0.0
    %323 = vmatpush1.msra.mxu0 0.0
    %324 = vmatprep.subr.mxu0 0.0
    %325 = vmatpush1.msra.mxu0 0.0
    %326 = vmatprep.subr.mxu0 0.0
    %327 = vmatpush1.msra.mxu0 0.0
    %328 = vmatprep.subr.mxu0 0.0
    %329 = vmatpush1.msra.mxu0 0.0
    %330 = vmatprep.subr.mxu0 0.0
    %331 = vmatpush1.msra.mxu0 0.0
    %332 = vmatprep.mubr.f32.mxu0 0.0
    %333 = vmatmul.mubr.f32.gmra.mrb[0].mxu0 %v263
    %v334 = vpop.f32.mrb[0].mxu0
    %v335 = vadd.f32 0.0, %v334
    %v336 = vpop.f32.mrb[0].mxu0
    %337 = vmatprep.mubr.f32.mxu0 0.0
    %338 = vmatmul.mubr.f32.gmra.mrb[0].mxu0 %v266
    %v339 = vpop.f32.mrb[0].mxu0
    %v340 = vadd.f32 0.0, %v339
    %v341 = vpop.f32.mrb[0].mxu0
    %342 = vdwg.mxu0
    %v344 = vsel %vm261, %v152, 0
    %v347 = vsel %vm261, %v157, 0
    %349 = vmatprep.subr.mxu0 0.0
    %350 = vmatpush1.msra.mxu0 %v160
    %351 = vmatprep.subr.mxu0 0.0
    %352 = vmatpush1.msra.mxu0 %v161
    %353 = vmatprep.subr.mxu0 0.0
    %354 = vmatpush1.msra.mxu0 %v162
    %355 = vmatprep.subr.mxu0 0.0
    %356 = vmatpush1.msra.mxu0 %v163
    %357 = vmatprep.subr.mxu0 0.0
    %358 = vmatpush1.msra.mxu0 %v164
    %359 = vmatprep.subr.mxu0 0.0
    %360 = vmatpush1.msra.mxu0 %v165
    %361 = vmatprep.subr.mxu0 0.0
    %362 = vmatpush1.msra.mxu0 %v166
    %363 = vmatprep.subr.mxu0 0.0
    %364 = vmatpush1.msra.mxu0 %v167
    %365 = vmatprep.subr.mxu0 0.0
    %366 = vmatpush1.msra.mxu0 0.0
    %367 = vmatprep.subr.mxu0 0.0
    %368 = vmatpush1.msra.mxu0 0.0
    %369 = vmatprep.subr.mxu0 0.0
    %370 = vmatpush1.msra.mxu0 0.0
    %371 = vmatprep.subr.mxu0 0.0
    %372 = vmatpush1.msra.mxu0 0.0
    %373 = vmatprep.subr.mxu0 0.0
    %374 = vmatpush1.msra.mxu0 0.0
    %375 = vmatprep.subr.mxu0 0.0
    %376 = vmatpush1.msra.mxu0 0.0
    %377 = vmatprep.subr.mxu0 0.0
    %378 = vmatpush1.msra.mxu0 0.0
    %379 = vmatprep.subr.mxu0 0.0
    %380 = vmatpush1.msra.mxu0 0.0
    %381 = vmatprep.subr.mxu0 0.0
    %382 = vmatpush1.msra.mxu0 0.0
    %383 = vmatprep.subr.mxu0 0.0
    %384 = vmatpush1.msra.mxu0 0.0
    %385 = vmatprep.subr.mxu0 0.0
    %386 = vmatpush1.msra.mxu0 0.0
    %387 = vmatprep.subr.mxu0 0.0
    %388 = vmatpush1.msra.mxu0 0.0
    %389 = vmatprep.subr.mxu0 0.0
    %390 = vmatpush1.msra.mxu0 0.0
    %391 = vmatprep.subr.mxu0 0.0
    %392 = vmatpush1.msra.mxu0 0.0
    %393 = vmatprep.subr.mxu0 0.0
    %394 = vmatpush1.msra.mxu0 0.0
    %395 = vmatprep.subr.mxu0 0.0
    %396 = vmatpush1.msra.mxu0 0.0
    %397 = vmatprep.subr.mxu0 0.0
    %398 = vmatpush1.msra.mxu0 0.0
    %399 = vmatprep.subr.mxu0 0.0
    %400 = vmatpush1.msra.mxu0 0.0
    %401 = vmatprep.subr.mxu0 0.0
    %402 = vmatpush1.msra.mxu0 0.0
    %403 = vmatprep.subr.mxu0 0.0
    %404 = vmatpush1.msra.mxu0 0.0
    %405 = vmatprep.subr.mxu0 0.0
    %406 = vmatpush1.msra.mxu0 0.0
    %407 = vmatprep.subr.mxu0 0.0
    %408 = vmatpush1.msra.mxu0 0.0
    %409 = vmatprep.subr.mxu0 0.0
    %410 = vmatpush1.msra.mxu0 0.0
    %411 = vmatprep.subr.mxu0 0.0
    %412 = vmatpush1.msra.mxu0 0.0
    %413 = vmatprep.mubr.f32.mxu0 0.0
    %414 = vmatmul.mubr.f32.gmra.mrb[0].mxu0 %v344
    %v415 = vpop.f32.mrb[0].mxu0
    %v416 = vadd.f32 %v335, %v415
    %v417 = vpop.f32.mrb[0].mxu0
    %418 = vmatprep.mubr.f32.mxu0 0.0
    %419 = vmatmul.mubr.f32.gmra.mrb[0].mxu0 %v347
    %v420 = vpop.f32.mrb[0].mxu0
    %v421 = vadd.f32 %v340, %v420
    %v422 = vpop.f32.mrb[0].mxu0
    %423 = vdwg.mxu0
    %s424 = scalar_lea.vmem [#allocation2], 32
    %v425 = vld [vmem:[%s424] sm:$0xff]
    %v426 = vld [vmem:[%s424 + $0x8] sm:$0xff]
    %v428 = vsel %vm78, %v425, 0
    %v431 = vsel %vm78, %v426, 0
    %433 = vmatprep.subr.mxu0 0.0
    %434 = vmatpush1.msra.mxu0 %v72
    %435 = vmatprep.subr.mxu0 0.0
    %436 = vmatpush1.msra.mxu0 %v73
    %437 = vmatprep.subr.mxu0 0.0
    %438 = vmatpush1.msra.mxu0 %v74
    %439 = vmatprep.subr.mxu0 0.0
    %440 = vmatpush1.msra.mxu0 %v75
    %441 = vmatprep.subr.mxu0 0.0
    %442 = vmatpush1.msra.mxu0 0.0
    %443 = vmatprep.subr.mxu0 0.0
    %444 = vmatpush1.msra.mxu0 0.0
    %445 = vmatprep.subr.mxu0 0.0
    %446 = vmatpush1.msra.mxu0 0.0
    %447 = vmatprep.subr.mxu0 0.0
    %448 = vmatpush1.msra.mxu0 0.0
    %449 = vmatprep.subr.mxu0 0.0
    %450 = vmatpush1.msra.mxu0 0.0
    %451 = vmatprep.subr.mxu0 0.0
    %452 = vmatpush1.msra.mxu0 0.0
    %453 = vmatprep.subr.mxu0 0.0
    %454 = vmatpush1.msra.mxu0 0.0
    %455 = vmatprep.subr.mxu0 0.0
    %456 = vmatpush1.msra.mxu0 0.0
    %457 = vmatprep.subr.mxu0 0.0
    %458 = vmatpush1.msra.mxu0 0.0
    %459 = vmatprep.subr.mxu0 0.0
    %460 = vmatpush1.msra.mxu0 0.0
    %461 = vmatprep.subr.mxu0 0.0
    %462 = vmatpush1.msra.mxu0 0.0
    %463 = vmatprep.subr.mxu0 0.0
    %464 = vmatpush1.msra.mxu0 0.0
    %465 = vmatprep.subr.mxu0 0.0
    %466 = vmatpush1.msra.mxu0 0.0
    %467 = vmatprep.subr.mxu0 0.0
    %468 = vmatpush1.msra.mxu0 0.0
    %469 = vmatprep.subr.mxu0 0.0
    %470 = vmatpush1.msra.mxu0 0.0
    %471 = vmatprep.subr.mxu0 0.0
    %472 = vmatpush1.msra.mxu0 0.0
    %473 = vmatprep.subr.mxu0 0.0
    %474 = vmatpush1.msra.mxu0 0.0
    %475 = vmatprep.subr.mxu0 0.0
    %476 = vmatpush1.msra.mxu0 0.0
    %477 = vmatprep.subr.mxu0 0.0
    %478 = vmatpush1.msra.mxu0 0.0
    %479 = vmatprep.subr.mxu0 0.0
    %480 = vmatpush1.msra.mxu0 0.0
    %481 = vmatprep.subr.mxu0 0.0
    %482 = vmatpush1.msra.mxu0 0.0
    %483 = vmatprep.subr.mxu0 0.0
    %484 = vmatpush1.msra.mxu0 0.0
    %485 = vmatprep.subr.mxu0 0.0
    %486 = vmatpush1.msra.mxu0 0.0
    %487 = vmatprep.subr.mxu0 0.0
    %488 = vmatpush1.msra.mxu0 0.0
    %489 = vmatprep.subr.mxu0 0.0
    %490 = vmatpush1.msra.mxu0 0.0
    %491 = vmatprep.subr.mxu0 0.0
    %492 = vmatpush1.msra.mxu0 0.0
    %493 = vmatprep.subr.mxu0 0.0
    %494 = vmatpush1.msra.mxu0 0.0
    %495 = vmatprep.subr.mxu0 0.0
    %496 = vmatpush1.msra.mxu0 0.0
    %497 = vmatprep.mubr.f32.mxu0 0.0
    %498 = vmatmul.mubr.f32.gmra.mrb[0].mxu0 %v428
    %v499 = vpop.f32.mrb[0].mxu0
    %v500 = vadd.f32 0.0, %v499
    %v501 = vpop.f32.mrb[0].mxu0
    %502 = vmatprep.mubr.f32.mxu0 0.0
    %503 = vmatmul.mubr.f32.gmra.mrb[0].mxu0 %v431
    %v504 = vpop.f32.mrb[0].mxu0
    %v505 = vadd.f32 0.0, %v504
    %v506 = vpop.f32.mrb[0].mxu0
    %507 = vdwg.mxu0
    %s508 = scalar_lea.vmem %s2, 128
    %v509 = vld [vmem:[%s508] sm:$0xff]
    %v510 = vld [vmem:[%s508 + $0x8] sm:$0xff]
    %v511 = vld [vmem:[%s508 + $0x10] sm:$0xff]
    %v512 = vld [vmem:[%s508 + $0x18] sm:$0xff]
    %v513 = vld [vmem:[%s508 + $0x20] sm:$0xff]
    %v514 = vld [vmem:[%s508 + $0x28] sm:$0xff]
    %v515 = vld [vmem:[%s508 + $0x30] sm:$0xff]
    %v516 = vld [vmem:[%s508 + $0x38] sm:$0xff]
    %v518 = vsel %vm261, %v500, 0
    %v521 = vsel %vm261, %v505, 0
    %523 = vmatprep.subr.mxu0 0.0
    %524 = vmatpush1.msra.mxu0 %v509
    %525 = vmatprep.subr.mxu0 0.0
    %526 = vmatpush1.msra.mxu0 %v510
    %527 = vmatprep.subr.mxu0 0.0
    %528 = vmatpush1.msra.mxu0 %v511
    %529 = vmatprep.subr.mxu0 0.0
    %530 = vmatpush1.msra.mxu0 %v512
    %531 = vmatprep.subr.mxu0 0.0
    %532 = vmatpush1.msra.mxu0 %v513
    %533 = vmatprep.subr.mxu0 0.0
    %534 = vmatpush1.msra.mxu0 %v514
    %535 = vmatprep.subr.mxu0 0.0
    %536 = vmatpush1.msra.mxu0 %v515
    %537 = vmatprep.subr.mxu0 0.0
    %538 = vmatpush1.msra.mxu0 %v516
    %539 = vmatprep.subr.mxu0 0.0
    %540 = vmatpush1.msra.mxu0 0.0
    %541 = vmatprep.subr.mxu0 0.0
    %542 = vmatpush1.msra.mxu0 0.0
    %543 = vmatprep.subr.mxu0 0.0
    %544 = vmatpush1.msra.mxu0 0.0
    %545 = vmatprep.subr.mxu0 0.0
    %546 = vmatpush1.msra.mxu0 0.0
    %547 = vmatprep.subr.mxu0 0.0
    %548 = vmatpush1.msra.mxu0 0.0
    %549 = vmatprep.subr.mxu0 0.0
    %550 = vmatpush1.msra.mxu0 0.0
    %551 = vmatprep.subr.mxu0 0.0
    %552 = vmatpush1.msra.mxu0 0.0
    %553 = vmatprep.subr.mxu0 0.0
    %554 = vmatpush1.msra.mxu0 0.0
    %555 = vmatprep.subr.mxu0 0.0
    %556 = vmatpush1.msra.mxu0 0.0
    %557 = vmatprep.subr.mxu0 0.0
    %558 = vmatpush1.msra.mxu0 0.0
    %559 = vmatprep.subr.mxu0 0.0
    %560 = vmatpush1.msra.mxu0 0.0
    %561 = vmatprep.subr.mxu0 0.0
    %562 = vmatpush1.msra.mxu0 0.0
    %563 = vmatprep.subr.mxu0 0.0
    %564 = vmatpush1.msra.mxu0 0.0
    %565 = vmatprep.subr.mxu0 0.0
    %566 = vmatpush1.msra.mxu0 0.0
    %567 = vmatprep.subr.mxu0 0.0
    %568 = vmatpush1.msra.mxu0 0.0
    %569 = vmatprep.subr.mxu0 0.0
    %570 = vmatpush1.msra.mxu0 0.0
    %571 = vmatprep.subr.mxu0 0.0
    %572 = vmatpush1.msra.mxu0 0.0
    %573 = vmatprep.subr.mxu0 0.0
    %574 = vmatpush1.msra.mxu0 0.0
    %575 = vmatprep.subr.mxu0 0.0
    %576 = vmatpush1.msra.mxu0 0.0
    %577 = vmatprep.subr.mxu0 0.0
    %578 = vmatpush1.msra.mxu0 0.0
    %579 = vmatprep.subr.mxu0 0.0
    %580 = vmatpush1.msra.mxu0 0.0
    %581 = vmatprep.subr.mxu0 0.0
    %582 = vmatpush1.msra.mxu0 0.0
    %583 = vmatprep.subr.mxu0 0.0
    %584 = vmatpush1.msra.mxu0 0.0
    %585 = vmatprep.subr.mxu0 0.0
    %586 = vmatpush1.msra.mxu0 0.0
    %587 = vmatprep.mubr.f32.mxu0 0.0
    %588 = vmatmul.mubr.f32.gmra.mrb[0].mxu0 %v518
    %v589 = vpop.f32.mrb[0].mxu0
    %v590 = vadd.f32 0.0, %v589
    %v591 = vpop.f32.mrb[0].mxu0
    %592 = vmatprep.mubr.f32.mxu0 0.0
    %593 = vmatmul.mubr.f32.gmra.mrb[0].mxu0 %v521
    %v594 = vpop.f32.mrb[0].mxu0
    %v595 = vadd.f32 0.0, %v594
    %v596 = vpop.f32.mrb[0].mxu0
    %597 = vdwg.mxu0
    %v598 = vadd.f32 %v416, %v590
    %v599 = vadd.f32 %v421, %v595
    %s600 = scalar_lea.vmem [#allocation2], 48
    %v601 = vld [vmem:[%s600] sm:$0xff]
    %v602 = vld [vmem:[%s600 + $0x8] sm:$0xff]
    %v604 = vsel %vm78, %v601, 0
    %v607 = vsel %vm78, %v602, 0
    %609 = vmatprep.subr.mxu0 0.0
    %610 = vmatpush1.msra.mxu0 %v72
    %611 = vmatprep.subr.mxu0 0.0
    %612 = vmatpush1.msra.mxu0 %v73
    %613 = vmatprep.subr.mxu0 0.0
    %614 = vmatpush1.msra.mxu0 %v74
    %615 = vmatprep.subr.mxu0 0.0
    %616 = vmatpush1.msra.mxu0 %v75
    %617 = vmatprep.subr.mxu0 0.0
    %618 = vmatpush1.msra.mxu0 0.0
    %619 = vmatprep.subr.mxu0 0.0
    %620 = vmatpush1.msra.mxu0 0.0
    %621 = vmatprep.subr.mxu0 0.0
    %622 = vmatpush1.msra.mxu0 0.0
    %623 = vmatprep.subr.mxu0 0.0
    %624 = vmatpush1.msra.mxu0 0.0
    %625 = vmatprep.subr.mxu0 0.0
    %626 = vmatpush1.msra.mxu0 0.0
    %627 = vmatprep.subr.mxu0 0.0
    %628 = vmatpush1.msra.mxu0 0.0
    %629 = vmatprep.subr.mxu0 0.0
    %630 = vmatpush1.msra.mxu0 0.0
    %631 = vmatprep.subr.mxu0 0.0
    %632 = vmatpush1.msra.mxu0 0.0
    %633 = vmatprep.subr.mxu0 0.0
    %634 = vmatpush1.msra.mxu0 0.0
    %635 = vmatprep.subr.mxu0 0.0
    %636 = vmatpush1.msra.mxu0 0.0
    %637 = vmatprep.subr.mxu0 0.0
    %638 = vmatpush1.msra.mxu0 0.0
    %639 = vmatprep.subr.mxu0 0.0
    %640 = vmatpush1.msra.mxu0 0.0
    %641 = vmatprep.subr.mxu0 0.0
    %642 = vmatpush1.msra.mxu0 0.0
    %643 = vmatprep.subr.mxu0 0.0
    %644 = vmatpush1.msra.mxu0 0.0
    %645 = vmatprep.subr.mxu0 0.0
    %646 = vmatpush1.msra.mxu0 0.0
    %647 = vmatprep.subr.mxu0 0.0
    %648 = vmatpush1.msra.mxu0 0.0
    %649 = vmatprep.subr.mxu0 0.0
    %650 = vmatpush1.msra.mxu0 0.0
    %651 = vmatprep.subr.mxu0 0.0
    %652 = vmatpush1.msra.mxu0 0.0
    %653 = vmatprep.subr.mxu0 0.0
    %654 = vmatpush1.msra.mxu0 0.0
    %655 = vmatprep.subr.mxu0 0.0
    %656 = vmatpush1.msra.mxu0 0.0
    %657 = vmatprep.subr.mxu0 0.0
    %658 = vmatpush1.msra.mxu0 0.0
    %659 = vmatprep.subr.mxu0 0.0
    %660 = vmatpush1.msra.mxu0 0.0
    %661 = vmatprep.subr.mxu0 0.0
    %662 = vmatpush1.msra.mxu0 0.0
    %663 = vmatprep.subr.mxu0 0.0
    %664 = vmatpush1.msra.mxu0 0.0
    %665 = vmatprep.subr.mxu0 0.0
    %666 = vmatpush1.msra.mxu0 0.0
    %667 = vmatprep.subr.mxu0 0.0
    %668 = vmatpush1.msra.mxu0 0.0
    %669 = vmatprep.subr.mxu0 0.0
    %670 = vmatpush1.msra.mxu0 0.0
    %671 = vmatprep.subr.mxu0 0.0
    %672 = vmatpush1.msra.mxu0 0.0
    %673 = vmatprep.mubr.f32.mxu0 0.0
    %674 = vmatmul.mubr.f32.gmra.mrb[0].mxu0 %v604
    %v675 = vpop.f32.mrb[0].mxu0
    %v676 = vadd.f32 0.0, %v675
    %v677 = vpop.f32.mrb[0].mxu0
    %678 = vmatprep.mubr.f32.mxu0 0.0
    %679 = vmatmul.mubr.f32.gmra.mrb[0].mxu0 %v607
    %v680 = vpop.f32.mrb[0].mxu0
    %v681 = vadd.f32 0.0, %v680
    %v682 = vpop.f32.mrb[0].mxu0
    %683 = vdwg.mxu0
    %s684 = scalar_lea.vmem %s2, 192
    %v685 = vld [vmem:[%s684] sm:$0xff]
    %v686 = vld [vmem:[%s684 + $0x8] sm:$0xff]
    %v687 = vld [vmem:[%s684 + $0x10] sm:$0xff]
    %v688 = vld [vmem:[%s684 + $0x18] sm:$0xff]
    %v689 = vld [vmem:[%s684 + $0x20] sm:$0xff]
    %v690 = vld [vmem:[%s684 + $0x28] sm:$0xff]
    %v691 = vld [vmem:[%s684 + $0x30] sm:$0xff]
    %v692 = vld [vmem:[%s684 + $0x38] sm:$0xff]
    %v694 = vsel %vm261, %v676, 0
    %v697 = vsel %vm261, %v681, 0
    %699 = vmatprep.subr.mxu0 0.0
    %700 = vmatpush1.msra.mxu0 %v685
    %701 = vmatprep.subr.mxu0 0.0
    %702 = vmatpush1.msra.mxu0 %v686
    %703 = vmatprep.subr.mxu0 0.0
    %704 = vmatpush1.msra.mxu0 %v687
    %705 = vmatprep.subr.mxu0 0.0
    %706 = vmatpush1.msra.mxu0 %v688
    %707 = vmatprep.subr.mxu0 0.0
    %708 = vmatpush1.msra.mxu0 %v689
    %709 = vmatprep.subr.mxu0 0.0
    %710 = vmatpush1.msra.mxu0 %v690
    %711 = vmatprep.subr.mxu0 0.0
    %712 = vmatpush1.msra.mxu0 %v691
    %713 = vmatprep.subr.mxu0 0.0
    %714 = vmatpush1.msra.mxu0 %v692
    %715 = vmatprep.subr.mxu0 0.0
    %716 = vmatpush1.msra.mxu0 0.0
    %717 = vmatprep.subr.mxu0 0.0
    %718 = vmatpush1.msra.mxu0 0.0
    %719 = vmatprep.subr.mxu0 0.0
    %720 = vmatpush1.msra.mxu0 0.0
    %721 = vmatprep.subr.mxu0 0.0
    %722 = vmatpush1.msra.mxu0 0.0
    %723 = vmatprep.subr.mxu0 0.0
    %724 = vmatpush1.msra.mxu0 0.0
    %725 = vmatprep.subr.mxu0 0.0
    %726 = vmatpush1.msra.mxu0 0.0
    %727 = vmatprep.subr.mxu0 0.0
    %728 = vmatpush1.msra.mxu0 0.0
    %729 = vmatprep.subr.mxu0 0.0
    %730 = vmatpush1.msra.mxu0 0.0
    %731 = vmatprep.subr.mxu0 0.0
    %732 = vmatpush1.msra.mxu0 0.0
    %733 = vmatprep.subr.mxu0 0.0
    %734 = vmatpush1.msra.mxu0 0.0
    %735 = vmatprep.subr.mxu0 0.0
    %736 = vmatpush1.msra.mxu0 0.0
    %737 = vmatprep.subr.mxu0 0.0
    %738 = vmatpush1.msra.mxu0 0.0
    %739 = vmatprep.subr.mxu0 0.0
    %740 = vmatpush1.msra.mxu0 0.0
    %741 = vmatprep.subr.mxu0 0.0
    %742 = vmatpush1.msra.mxu0 0.0
    %743 = vmatprep.subr.mxu0 0.0
    %744 = vmatpush1.msra.mxu0 0.0
    %745 = vmatprep.subr.mxu0 0.0
    %746 = vmatpush1.msra.mxu0 0.0
    %747 = vmatprep.subr.mxu0 0.0
    %748 = vmatpush1.msra.mxu0 0.0
    %749 = vmatprep.subr.mxu0 0.0
    %750 = vmatpush1.msra.mxu0 0.0
    %751 = vmatprep.subr.mxu0 0.0
    %752 = vmatpush1.msra.mxu0 0.0
    %753 = vmatprep.subr.mxu0 0.0
    %754 = vmatpush1.msra.mxu0 0.0
    %755 = vmatprep.subr.mxu0 0.0
    %756 = vmatpush1.msra.mxu0 0.0
    %757 = vmatprep.subr.mxu0 0.0
    %758 = vmatpush1.msra.mxu0 0.0
    %759 = vmatprep.subr.mxu0 0.0
    %760 = vmatpush1.msra.mxu0 0.0
    %761 = vmatprep.subr.mxu0 0.0
    %762 = vmatpush1.msra.mxu0 0.0
    %763 = vmatprep.mubr.f32.mxu0 0.0
    %764 = vmatmul.mubr.f32.gmra.mrb[0].mxu0 %v694
    %v765 = vpop.f32.mrb[0].mxu0
    %v766 = vadd.f32 0.0, %v765
    %v767 = vpop.f32.mrb[0].mxu0
    %768 = vmatprep.mubr.f32.mxu0 0.0
    %769 = vmatmul.mubr.f32.gmra.mrb[0].mxu0 %v697
    %v770 = vpop.f32.mrb[0].mxu0
    %v771 = vadd.f32 0.0, %v770
    %v772 = vpop.f32.mrb[0].mxu0
    %773 = vdwg.mxu0
    %v774 = vadd.f32 %v598, %v766
    %v775 = vadd.f32 %v599, %v771
    %v776 = vsel %vm261, %v774, 0.0
    %v777 = vsel %vm261, %v775, 0.0
    %v778 = vadd.f32 %v776, %v777
    %v779 = vrot.slane %v778, 4
    %v780 = vadd.f32 %v778, %v779
    %v781 = vrot.slane %v780, 2
    %v782 = vadd.f32 %v780, %v781
    %v783 = vrot.slane %v782, 1
    %v784 = vadd.f32 %v782, %v783
    %v785 = vmul.f32 %v774, %v774
    %v786 = vmul.f32 %v775, %v775
    %v787 = vsel %vm261, %v785, 0.0
    %v788 = vsel %vm261, %v786, 0.0
    %v789 = vadd.f32 %v787, %v788
    %v790 = vrot.slane %v789, 4
    %v791 = vadd.f32 %v789, %v790
    %v792 = vrot.slane %v791, 2
    %v793 = vadd.f32 %v791, %v792
    %v794 = vrot.slane %v793, 1
    %v795 = vadd.f32 %v793, %v794
    %797 = vrot.lane.b32.xlu0 %v784, 120
    %v798 = vpop.permute.xlu0 %797
    %v800 = vadd.f32 %v784, %v798
    %802 = vrot.lane.b32.xlu0 %v795, 120
    %v803 = vpop.permute.xlu0 %802
    %v805 = vadd.f32 %v795, %v803
    %806 = vrot.lane.b32.xlu0 %v784, 112
    %v807 = vpop.permute.xlu0 %806
    %v809 = vadd.f32 %v800, %v807
    %810 = vrot.lane.b32.xlu0 %v795, 112
    %v811 = vpop.permute.xlu0 %810
    %v813 = vadd.f32 %v805, %v811
    %814 = vrot.lane.b32.xlu0 %v784, 104
    %v815 = vpop.permute.xlu0 %814
    %v817 = vadd.f32 %v809, %v815
    %818 = vrot.lane.b32.xlu0 %v795, 104
    %v819 = vpop.permute.xlu0 %818
    %v821 = vadd.f32 %v813, %v819
    %822 = vrot.lane.b32.xlu0 %v784, 96
    %v823 = vpop.permute.xlu0 %822
    %v825 = vadd.f32 %v817, %v823
    %826 = vrot.lane.b32.xlu0 %v795, 96
    %v827 = vpop.permute.xlu0 %826
    %v829 = vadd.f32 %v821, %v827
    %830 = vrot.lane.b32.xlu0 %v784, 88
    %v831 = vpop.permute.xlu0 %830
    %v833 = vadd.f32 %v825, %v831
    %834 = vrot.lane.b32.xlu0 %v795, 88
    %v835 = vpop.permute.xlu0 %834
    %v837 = vadd.f32 %v829, %v835
    %838 = vrot.lane.b32.xlu0 %v784, 80
    %v839 = vpop.permute.xlu0 %838
    %v841 = vadd.f32 %v833, %v839
    %842 = vrot.lane.b32.xlu0 %v795, 80
    %v843 = vpop.permute.xlu0 %842
    %v845 = vadd.f32 %v837, %v843
    %846 = vrot.lane.b32.xlu0 %v784, 72
    %v847 = vpop.permute.xlu0 %846
    %v849 = vadd.f32 %v841, %v847
    %850 = vrot.lane.b32.xlu0 %v795, 72
    %v851 = vpop.permute.xlu0 %850
    %v853 = vadd.f32 %v845, %v851
    %v854 = vmul.f32 %v849, 0.0078125
    %v855 = vmul.f32 %v853, 0.0078125
    %v856 = vmul.f32 %v854, %v854
    %v857 = vsub.f32 %v855, %v856
    %v858 = vld [vmem:[%s3] sm:$0x1]
    %v859 = vadd.f32 %v857, 1e-05
    %v860 = vrsqrt.pop %v859
    %v861 = vmul.f32 %v858, %v860
    %v862 = vld [vmem:[%s4] sm:$0x1]
    %v863 = vmul.f32 %v854, %v861
    %v864 = vsub.f32 %v862, %v863
    %v866 = vlaneseq
    %v867 = vshrl.u32 %v866, 7
    %v868 = vsub.s32 0, %v867
    %v869 = vrot.slane %v861, %v868
    %870 = vrot.lane.b32.xlu0 %v869, 8
    %v871 = vpop.permute.xlu0 %870
    %873 = vrot.lane.b32.xlu0 %v869, 16
    %v874 = vpop.permute.xlu0 %873
    %876 = vrot.lane.b32.xlu0 %v869, 24
    %v877 = vpop.permute.xlu0 %876
    %879 = vrot.lane.b32.xlu0 %v869, 32
    %v880 = vpop.permute.xlu0 %879
    %882 = vrot.lane.b32.xlu0 %v869, 40
    %v883 = vpop.permute.xlu0 %882
    %885 = vrot.lane.b32.xlu0 %v869, 48
    %v886 = vpop.permute.xlu0 %885
    %888 = vrot.lane.b32.xlu0 %v869, 56
    %v889 = vpop.permute.xlu0 %888
    %vm891 = vcmask 64512
    %v892 = vsel %vm891, %v861, %v871
    %vm893 = vcmask 130048
    %v894 = vsel %vm893, %v892, %v874
    %vm895 = vcmask 195584
    %v896 = vsel %vm895, %v894, %v877
    %v897 = vsel %vm78, %v896, %v880
    %vm898 = vcmask 326656
    %v899 = vsel %vm898, %v897, %v883
    %vm900 = vcmask 392192
    %v901 = vsel %vm900, %v899, %v886
    %vm902 = vcmask 457728
    %v903 = vsel %vm902, %v901, %v889
    %v905 = vlaneseq
    %v906 = vshrl.u32 %v905, 7
    %v907 = vsub.s32 0, %v906
    %v908 = vrot.slane %v864, %v907
    %909 = vrot.lane.b32.xlu0 %v908, 8
    %v910 = vpop.permute.xlu0 %909
    %912 = vrot.lane.b32.xlu0 %v908, 16
    %v913 = vpop.permute.xlu0 %912
    %915 = vrot.lane.b32.xlu0 %v908, 24
    %v916 = vpop.permute.xlu0 %915
    %918 = vrot.lane.b32.xlu0 %v908, 32
    %v919 = vpop.permute.xlu0 %918
    %921 = vrot.lane.b32.xlu0 %v908, 40
    %v922 = vpop.permute.xlu0 %921
    %924 = vrot.lane.b32.xlu0 %v908, 48
    %v925 = vpop.permute.xlu0 %924
    %927 = vrot.lane.b32.xlu0 %v908, 56
    %v928 = vpop.permute.xlu0 %927
    %v930 = vsel %vm891, %v864, %v910
    %v931 = vsel %vm893, %v930, %v913
    %v932 = vsel %vm895, %v931, %v916
    %v933 = vsel %vm78, %v932, %v919
    %v934 = vsel %vm898, %v933, %v922
    %v935 = vsel %vm900, %v934, %v925
    %v936 = vsel %vm902, %v935, %v928
    %v937 = vlaneseq
    %v938 = vshrl.u32 %v937, 7
    %v939 = vsub.s32 0, %v938
    %v940 = vrot.slane %v903, %v939
    %v941 = vmul.f32 %v774, %v940
    %v942 = vmul.f32 %v775, %v940
    %v943 = vlaneseq
    %v944 = vshrl.u32 %v943, 7
    %v945 = vsub.s32 0, %v944
    %v946 = vrot.slane %v936, %v945
    %v947 = vadd.f32 %v941, %v946
    %v948 = vadd.f32 %v942, %v946
    %v949 = vmax.f32 %v947, 0.0
    %v950 = vmax.f32 %v948, 0.0
    %v951 = vld [vmem:[%s5] sm:$0xff]
    %v953 = vsel %vm893, %v951, 0
    %955 = vmatprep.subr.mxu0 0.0
    %956 = vmatpush1.msra.mxu0 %v949
    %957 = vmatprep.subr.mxu0 0.0
    %958 = vmatpush1.msra.mxu0 %v950
    %959 = vmatprep.subr.mxu0 0.0
    %960 = vmatpush1.msra.mxu0 0.0
    %961 = vmatprep.subr.mxu0 0.0
    %962 = vmatpush1.msra.mxu0 0.0
    %963 = vmatprep.subr.mxu0 0.0
    %964 = vmatpush1.msra.mxu0 0.0
    %965 = vmatprep.subr.mxu0 0.0
    %966 = vmatpush1.msra.mxu0 0.0
    %967 = vmatprep.subr.mxu0 0.0
    %968 = vmatpush1.msra.mxu0 0.0
    %969 = vmatprep.subr.mxu0 0.0
    %970 = vmatpush1.msra.mxu0 0.0
    %971 = vmatprep.subr.mxu0 0.0
    %972 = vmatpush1.msra.mxu0 0.0
    %973 = vmatprep.subr.mxu0 0.0
    %974 = vmatpush1.msra.mxu0 0.0
    %975 = vmatprep.subr.mxu0 0.0
    %976 = vmatpush1.msra.mxu0 0.0
    %977 = vmatprep.subr.mxu0 0.0
    %978 = vmatpush1.msra.mxu0 0.0
    %979 = vmatprep.subr.mxu0 0.0
    %980 = vmatpush1.msra.mxu0 0.0
    %981 = vmatprep.subr.mxu0 0.0
    %982 = vmatpush1.msra.mxu0 0.0
    %983 = vmatprep.subr.mxu0 0.0
    %984 = vmatpush1.msra.mxu0 0.0
    %985 = vmatprep.subr.mxu0 0.0
    %986 = vmatpush1.msra.mxu0 0.0
    %987 = vmatprep.subr.mxu0 0.0
    %988 = vmatpush1.msra.mxu0 0.0
    %989 = vmatprep.subr.mxu0 0.0
    %990 = vmatpush1.msra.mxu0 0.0
    %991 = vmatprep.subr.mxu0 0.0
    %992 = vmatpush1.msra.mxu0 0.0
    %993 = vmatprep.subr.mxu0 0.0
    %994 = vmatpush1.msra.mxu0 0.0
    %995 = vmatprep.subr.mxu0 0.0
    %996 = vmatpush1.msra.mxu0 0.0
    %997 = vmatprep.subr.mxu0 0.0
    %998 = vmatpush1.msra.mxu0 0.0
    %999 = vmatprep.subr.mxu0 0.0
    %1000 = vmatpush1.msra.mxu0 0.0
    %1001 = vmatprep.subr.mxu0 0.0
    %1002 = vmatpush1.msra.mxu0 0.0
    %1003 = vmatprep.subr.mxu0 0.0
    %1004 = vmatpush1.msra.mxu0 0.0
    %1005 = vmatprep.subr.mxu0 0.0
    %1006 = vmatpush1.msra.mxu0 0.0
    %1007 = vmatprep.subr.mxu0 0.0
    %1008 = vmatpush1.msra.mxu0 0.0
    %1009 = vmatprep.subr.mxu0 0.0
    %1010 = vmatpush1.msra.mxu0 0.0
    %1011 = vmatprep.subr.mxu0 0.0
    %1012 = vmatpush1.msra.mxu0 0.0
    %1013 = vmatprep.subr.mxu0 0.0
    %1014 = vmatpush1.msra.mxu0 0.0
    %1015 = vmatprep.subr.mxu0 0.0
    %1016 = vmatpush1.msra.mxu0 0.0
    %1017 = vmatprep.subr.mxu0 0.0
    %1018 = vmatpush1.msra.mxu0 0.0
    %1019 = vmatprep.mubr.f32.mxu0 0.0
    %1020 = vmatmul.mubr.f32.gmra.mrb[0].mxu0 %v953
    %v1021 = vpop.f32.mrb[0].mxu0
    %v1022 = vadd.f32 0.0, %v1021
    %v1023 = vpop.f32.mrb[0].mxu0
    %1024 = vdwg.mxu0
    %v1025 = vld [vmem:[%s6] sm:$0xff]
    %v1026 = vld [vmem:[%s6 + $0x8] sm:$0xff]
    %v1027 = vld [vmem:[%s6 + $0x10] sm:$0xff]
    %v1028 = vld [vmem:[%s6 + $0x18] sm:$0xff]
    %v1029 = vld [vmem:[%s6 + $0x20] sm:$0xff]
    %v1030 = vld [vmem:[%s6 + $0x28] sm:$0xff]
    %v1031 = vld [vmem:[%s6 + $0x30] sm:$0xff]
    %v1032 = vld [vmem:[%s6 + $0x38] sm:$0xff]
    %s1033 = scalar_lea.vmem %s5, 8
    %v1034 = vld [vmem:[%s1033] sm:$0xff]
    %v1036 = vsel %vm893, %v1034, 0
    %1038 = vmatprep.subr.mxu0 0.0
    %1039 = vmatpush1.msra.mxu0 %v949
    %1040 = vmatprep.subr.mxu0 0.0
    %1041 = vmatpush1.msra.mxu0 %v950
    %1042 = vmatprep.subr.mxu0 0.0
    %1043 = vmatpush1.msra.mxu0 0.0
    %1044 = vmatprep.subr.mxu0 0.0
    %1045 = vmatpush1.msra.mxu0 0.0
    %1046 = vmatprep.subr.mxu0 0.0
    %1047 = vmatpush1.msra.mxu0 0.0
    %1048 = vmatprep.subr.mxu0 0.0
    %1049 = vmatpush1.msra.mxu0 0.0
    %1050 = vmatprep.subr.mxu0 0.0
    %1051 = vmatpush1.msra.mxu0 0.0
    %1052 = vmatprep.subr.mxu0 0.0
    %1053 = vmatpush1.msra.mxu0 0.0
    %1054 = vmatprep.subr.mxu0 0.0
    %1055 = vmatpush1.msra.mxu0 0.0
    %1056 = vmatprep.subr.mxu0 0.0
    %1057 = vmatpush1.msra.mxu0 0.0
    %1058 = vmatprep.subr.mxu0 0.0
    %1059 = vmatpush1.msra.mxu0 0.0
    %1060 = vmatprep.subr.mxu0 0.0
    %1061 = vmatpush1.msra.mxu0 0.0
    %1062 = vmatprep.subr.mxu0 0.0
    %1063 = vmatpush1.msra.mxu0 0.0
    %1064 = vmatprep.subr.mxu0 0.0
    %1065 = vmatpush1.msra.mxu0 0.0
    %1066 = vmatprep.subr.mxu0 0.0
    %1067 = vmatpush1.msra.mxu0 0.0
    %1068 = vmatprep.subr.mxu0 0.0
    %1069 = vmatpush1.msra.mxu0 0.0
    %1070 = vmatprep.subr.mxu0 0.0
    %1071 = vmatpush1.msra.mxu0 0.0
    %1072 = vmatprep.subr.mxu0 0.0
    %1073 = vmatpush1.msra.mxu0 0.0
    %1074 = vmatprep.subr.mxu0 0.0
    %1075 = vmatpush1.msra.mxu0 0.0
    %1076 = vmatprep.subr.mxu0 0.0
    %1077 = vmatpush1.msra.mxu0 0.0
    %1078 = vmatprep.subr.mxu0 0.0
    %1079 = vmatpush1.msra.mxu0 0.0
    %1080 = vmatprep.subr.mxu0 0.0
    %1081 = vmatpush1.msra.mxu0 0.0
    %1082 = vmatprep.subr.mxu0 0.0
    %1083 = vmatpush1.msra.mxu0 0.0
    %1084 = vmatprep.subr.mxu0 0.0
    %1085 = vmatpush1.msra.mxu0 0.0
    %1086 = vmatprep.subr.mxu0 0.0
    %1087 = vmatpush1.msra.mxu0 0.0
    %1088 = vmatprep.subr.mxu0 0.0
    %1089 = vmatpush1.msra.mxu0 0.0
    %1090 = vmatprep.subr.mxu0 0.0
    %1091 = vmatpush1.msra.mxu0 0.0
    %1092 = vmatprep.subr.mxu0 0.0
    %1093 = vmatpush1.msra.mxu0 0.0
    %1094 = vmatprep.subr.mxu0 0.0
    %1095 = vmatpush1.msra.mxu0 0.0
    %1096 = vmatprep.subr.mxu0 0.0
    %1097 = vmatpush1.msra.mxu0 0.0
    %1098 = vmatprep.subr.mxu0 0.0
    %1099 = vmatpush1.msra.mxu0 0.0
    %1100 = vmatprep.subr.mxu0 0.0
    %1101 = vmatpush1.msra.mxu0 0.0
    %1102 = vmatprep.mubr.f32.mxu0 0.0
    %1103 = vmatmul.mubr.f32.gmra.mrb[0].mxu0 %v1036
    %v1104 = vpop.f32.mrb[0].mxu0
    %v1105 = vadd.f32 0.0, %v1104
    %v1106 = vpop.f32.mrb[0].mxu0
    %1107 = vdwg.mxu0
    %s1108 = scalar_lea.vmem %s6, 64
    %v1109 = vld [vmem:[%s1108] sm:$0xff]
    %v1110 = vld [vmem:[%s1108 + $0x8] sm:$0xff]
    %v1111 = vld [vmem:[%s1108 + $0x10] sm:$0xff]
    %v1112 = vld [vmem:[%s1108 + $0x18] sm:$0xff]
    %v1113 = vld [vmem:[%s1108 + $0x20] sm:$0xff]
    %v1114 = vld [vmem:[%s1108 + $0x28] sm:$0xff]
    %v1115 = vld [vmem:[%s1108 + $0x30] sm:$0xff]
    %v1116 = vld [vmem:[%s1108 + $0x38] sm:$0xff]
    %v1118 = vsel %vm261, %v1105, 0
    %1120 = vmatprep.subr.mxu0 0.0
    %1121 = vmatpush1.msra.mxu0 %v1109
    %1122 = vmatprep.subr.mxu0 0.0
    %1123 = vmatpush1.msra.mxu0 %v1110
    %1124 = vmatprep.subr.mxu0 0.0
    %1125 = vmatpush1.msra.mxu0 %v1111
    %1126 = vmatprep.subr.mxu0 0.0
    %1127 = vmatpush1.msra.mxu0 %v1112
    %1128 = vmatprep.subr.mxu0 0.0
    %1129 = vmatpush1.msra.mxu0 %v1113
    %1130 = vmatprep.subr.mxu0 0.0
    %1131 = vmatpush1.msra.mxu0 %v1114
    %1132 = vmatprep.subr.mxu0 0.0
    %1133 = vmatpush1.msra.mxu0 %v1115
    %1134 = vmatprep.subr.mxu0 0.0
    %1135 = vmatpush1.msra.mxu0 %v1116
    %1136 = vmatprep.subr.mxu0 0.0
    %1137 = vmatpush1.msra.mxu0 0.0
    %1138 = vmatprep.subr.mxu0 0.0
    %1139 = vmatpush1.msra.mxu0 0.0
    %1140 = vmatprep.subr.mxu0 0.0
    %1141 = vmatpush1.msra.mxu0 0.0
    %1142 = vmatprep.subr.mxu0 0.0
    %1143 = vmatpush1.msra.mxu0 0.0
    %1144 = vmatprep.subr.mxu0 0.0
    %1145 = vmatpush1.msra.mxu0 0.0
    %1146 = vmatprep.subr.mxu0 0.0
    %1147 = vmatpush1.msra.mxu0 0.0
    %1148 = vmatprep.subr.mxu0 0.0
    %1149 = vmatpush1.msra.mxu0 0.0
    %1150 = vmatprep.subr.mxu0 0.0
    %1151 = vmatpush1.msra.mxu0 0.0
    %1152 = vmatprep.subr.mxu0 0.0
    %1153 = vmatpush1.msra.mxu0 0.0
    %1154 = vmatprep.subr.mxu0 0.0
    %1155 = vmatpush1.msra.mxu0 0.0
    %1156 = vmatprep.subr.mxu0 0.0
    %1157 = vmatpush1.msra.mxu0 0.0
    %1158 = vmatprep.subr.mxu0 0.0
    %1159 = vmatpush1.msra.mxu0 0.0
    %1160 = vmatprep.subr.mxu0 0.0
    %1161 = vmatpush1.msra.mxu0 0.0
    %1162 = vmatprep.subr.mxu0 0.0
    %1163 = vmatpush1.msra.mxu0 0.0
    %1164 = vmatprep.subr.mxu0 0.0
    %1165 = vmatpush1.msra.mxu0 0.0
    %1166 = vmatprep.subr.mxu0 0.0
    %1167 = vmatpush1.msra.mxu0 0.0
    %1168 = vmatprep.subr.mxu0 0.0
    %1169 = vmatpush1.msra.mxu0 0.0
    %1170 = vmatprep.subr.mxu0 0.0
    %1171 = vmatpush1.msra.mxu0 0.0
    %1172 = vmatprep.subr.mxu0 0.0
    %1173 = vmatpush1.msra.mxu0 0.0
    %1174 = vmatprep.subr.mxu0 0.0
    %1175 = vmatpush1.msra.mxu0 0.0
    %1176 = vmatprep.subr.mxu0 0.0
    %1177 = vmatpush1.msra.mxu0 0.0
    %1178 = vmatprep.subr.mxu0 0.0
    %1179 = vmatpush1.msra.mxu0 0.0
    %1180 = vmatprep.subr.mxu0 0.0
    %1181 = vmatpush1.msra.mxu0 0.0
    %1182 = vmatprep.subr.mxu0 0.0
    %1183 = vmatpush1.msra.mxu0 0.0
    %1184 = vmatprep.mubr.f32.mxu0 0.0
    %1185 = vmatmul.mubr.f32.gmra.mrb[0].mxu0 %v1118
    %v1186 = vpop.f32.mrb[0].mxu0
    %v1187 = vadd.f32 0.0, %v1186
    %v1188 = vpop.f32.mrb[0].mxu0
    %1189 = vdwg.mxu0
    %v1191 = vsel %vm261, %v1022, 0
    %1193 = vmatprep.subr.mxu0 0.0
    %1194 = vmatpush1.msra.mxu0 %v1025
    %1195 = vmatprep.subr.mxu0 0.0
    %1196 = vmatpush1.msra.mxu0 %v1026
    %1197 = vmatprep.subr.mxu0 0.0
    %1198 = vmatpush1.msra.mxu0 %v1027
    %1199 = vmatprep.subr.mxu0 0.0
    %1200 = vmatpush1.msra.mxu0 %v1028
    %1201 = vmatprep.subr.mxu0 0.0
    %1202 = vmatpush1.msra.mxu0 %v1029
    %1203 = vmatprep.subr.mxu0 0.0
    %1204 = vmatpush1.msra.mxu0 %v1030
    %1205 = vmatprep.subr.mxu0 0.0
    %1206 = vmatpush1.msra.mxu0 %v1031
    %1207 = vmatprep.subr.mxu0 0.0
    %1208 = vmatpush1.msra.mxu0 %v1032
    %1209 = vmatprep.subr.mxu0 0.0
    %1210 = vmatpush1.msra.mxu0 0.0
    %1211 = vmatprep.subr.mxu0 0.0
    %1212 = vmatpush1.msra.mxu0 0.0
    %1213 = vmatprep.subr.mxu0 0.0
    %1214 = vmatpush1.msra.mxu0 0.0
    %1215 = vmatprep.subr.mxu0 0.0
    %1216 = vmatpush1.msra.mxu0 0.0
    %1217 = vmatprep.subr.mxu0 0.0
    %1218 = vmatpush1.msra.mxu0 0.0
    %1219 = vmatprep.subr.mxu0 0.0
    %1220 = vmatpush1.msra.mxu0 0.0
    %1221 = vmatprep.subr.mxu0 0.0
    %1222 = vmatpush1.msra.mxu0 0.0
    %1223 = vmatprep.subr.mxu0 0.0
    %1224 = vmatpush1.msra.mxu0 0.0
    %1225 = vmatprep.subr.mxu0 0.0
    %1226 = vmatpush1.msra.mxu0 0.0
    %1227 = vmatprep.subr.mxu0 0.0
    %1228 = vmatpush1.msra.mxu0 0.0
    %1229 = vmatprep.subr.mxu0 0.0
    %1230 = vmatpush1.msra.mxu0 0.0
    %1231 = vmatprep.subr.mxu0 0.0
    %1232 = vmatpush1.msra.mxu0 0.0
    %1233 = vmatprep.subr.mxu0 0.0
    %1234 = vmatpush1.msra.mxu0 0.0
    %1235 = vmatprep.subr.mxu0 0.0
    %1236 = vmatpush1.msra.mxu0 0.0
    %1237 = vmatprep.subr.mxu0 0.0
    %1238 = vmatpush1.msra.mxu0 0.0
    %1239 = vmatprep.subr.mxu0 0.0
    %1240 = vmatpush1.msra.mxu0 0.0
    %1241 = vmatprep.subr.mxu0 0.0
    %1242 = vmatpush1.msra.mxu0 0.0
    %1243 = vmatprep.subr.mxu0 0.0
    %1244 = vmatpush1.msra.mxu0 0.0
    %1245 = vmatprep.subr.mxu0 0.0
    %1246 = vmatpush1.msra.mxu0 0.0
    %1247 = vmatprep.subr.mxu0 0.0
    %1248 = vmatpush1.msra.mxu0 0.0
    %1249 = vmatprep.subr.mxu0 0.0
    %1250 = vmatpush1.msra.mxu0 0.0
    %1251 = vmatprep.subr.mxu0 0.0
    %1252 = vmatpush1.msra.mxu0 0.0
    %1253 = vmatprep.subr.mxu0 0.0
    %1254 = vmatpush1.msra.mxu0 0.0
    %1255 = vmatprep.subr.mxu0 0.0
    %1256 = vmatpush1.msra.mxu0 0.0
    %1257 = vmatprep.mubr.f32.mxu0 0.0
    %1258 = vmatmul.mubr.f32.gmra.mrb[0].mxu0 %v1191
    %v1259 = vpop.f32.mrb[0].mxu0
    %v1260 = vadd.f32 %v1187, %v1259
    %v1261 = vpop.f32.mrb[0].mxu0
    %1262 = vdwg.mxu0
    %s1263 = scalar_lea.vmem %s5, 16
    %v1264 = vld [vmem:[%s1263] sm:$0xff]
    %v1266 = vsel %vm893, %v1264, 0
    %1268 = vmatprep.subr.mxu0 0.0
    %1269 = vmatpush1.msra.mxu0 %v949
    %1270 = vmatprep.subr.mxu0 0.0
    %1271 = vmatpush1.msra.mxu0 %v950
    %1272 = vmatprep.subr.mxu0 0.0
    %1273 = vmatpush1.msra.mxu0 0.0
    %1274 = vmatprep.subr.mxu0 0.0
    %1275 = vmatpush1.msra.mxu0 0.0
    %1276 = vmatprep.subr.mxu0 0.0
    %1277 = vmatpush1.msra.mxu0 0.0
    %1278 = vmatprep.subr.mxu0 0.0
    %1279 = vmatpush1.msra.mxu0 0.0
    %1280 = vmatprep.subr.mxu0 0.0
    %1281 = vmatpush1.msra.mxu0 0.0
    %1282 = vmatprep.subr.mxu0 0.0
    %1283 = vmatpush1.msra.mxu0 0.0
    %1284 = vmatprep.subr.mxu0 0.0
    %1285 = vmatpush1.msra.mxu0 0.0
    %1286 = vmatprep.subr.mxu0 0.0
    %1287 = vmatpush1.msra.mxu0 0.0
    %1288 = vmatprep.subr.mxu0 0.0
    %1289 = vmatpush1.msra.mxu0 0.0
    %1290 = vmatprep.subr.mxu0 0.0
    %1291 = vmatpush1.msra.mxu0 0.0
    %1292 = vmatprep.subr.mxu0 0.0
    %1293 = vmatpush1.msra.mxu0 0.0
    %1294 = vmatprep.subr.mxu0 0.0
    %1295 = vmatpush1.msra.mxu0 0.0
    %1296 = vmatprep.subr.mxu0 0.0
    %1297 = vmatpush1.msra.mxu0 0.0
    %1298 = vmatprep.subr.mxu0 0.0
    %1299 = vmatpush1.msra.mxu0 0.0
    %1300 = vmatprep.subr.mxu0 0.0
    %1301 = vmatpush1.msra.mxu0 0.0
    %1302 = vmatprep.subr.mxu0 0.0
    %1303 = vmatpush1.msra.mxu0 0.0
    %1304 = vmatprep.subr.mxu0 0.0
    %1305 = vmatpush1.msra.mxu0 0.0
    %1306 = vmatprep.subr.mxu0 0.0
    %1307 = vmatpush1.msra.mxu0 0.0
    %1308 = vmatprep.subr.mxu0 0.0
    %1309 = vmatpush1.msra.mxu0 0.0
    %1310 = vmatprep.subr.mxu0 0.0
    %1311 = vmatpush1.msra.mxu0 0.0
    %1312 = vmatprep.subr.mxu0 0.0
    %1313 = vmatpush1.msra.mxu0 0.0
    %1314 = vmatprep.subr.mxu0 0.0
    %1315 = vmatpush1.msra.mxu0 0.0
    %1316 = vmatprep.subr.mxu0 0.0
    %1317 = vmatpush1.msra.mxu0 0.0
    %1318 = vmatprep.subr.mxu0 0.0
    %1319 = vmatpush1.msra.mxu0 0.0
    %1320 = vmatprep.subr.mxu0 0.0
    %1321 = vmatpush1.msra.mxu0 0.0
    %1322 = vmatprep.subr.mxu0 0.0
    %1323 = vmatpush1.msra.mxu0 0.0
    %1324 = vmatprep.subr.mxu0 0.0
    %1325 = vmatpush1.msra.mxu0 0.0
    %1326 = vmatprep.subr.mxu0 0.0
    %1327 = vmatpush1.msra.mxu0 0.0
    %1328 = vmatprep.subr.mxu0 0.0
    %1329 = vmatpush1.msra.mxu0 0.0
    %1330 = vmatprep.subr.mxu0 0.0
    %1331 = vmatpush1.msra.mxu0 0.0
    %1332 = vmatprep.mubr.f32.mxu0 0.0
    %1333 = vmatmul.mubr.f32.gmra.mrb[0].mxu0 %v1266
    %v1334 = vpop.f32.mrb[0].mxu0
    %v1335 = vadd.f32 0.0, %v1334
    %v1336 = vpop.f32.mrb[0].mxu0
    %1337 = vdwg.mxu0
    %s1338 = scalar_lea.vmem %s6, 128
    %v1339 = vld [vmem:[%s1338] sm:$0xff]
    %v1340 = vld [vmem:[%s1338 + $0x8] sm:$0xff]
    %v1341 = vld [vmem:[%s1338 + $0x10] sm:$0xff]
    %v1342 = vld [vmem:[%s1338 + $0x18] sm:$0xff]
    %v1343 = vld [vmem:[%s1338 + $0x20] sm:$0xff]
    %v1344 = vld [vmem:[%s1338 + $0x28] sm:$0xff]
    %v1345 = vld [vmem:[%s1338 + $0x30] sm:$0xff]
    %v1346 = vld [vmem:[%s1338 + $0x38] sm:$0xff]
    %v1348 = vsel %vm261, %v1335, 0
    %1350 = vmatprep.subr.mxu0 0.0
    %1351 = vmatpush1.msra.mxu0 %v1339
    %1352 = vmatprep.subr.mxu0 0.0
    %1353 = vmatpush1.msra.mxu0 %v1340
    %1354 = vmatprep.subr.mxu0 0.0
    %1355 = vmatpush1.msra.mxu0 %v1341
    %1356 = vmatprep.subr.mxu0 0.0
    %1357 = vmatpush1.msra.mxu0 %v1342
    %1358 = vmatprep.subr.mxu0 0.0
    %1359 = vmatpush1.msra.mxu0 %v1343
    %1360 = vmatprep.subr.mxu0 0.0
    %1361 = vmatpush1.msra.mxu0 %v1344
    %1362 = vmatprep.subr.mxu0 0.0
    %1363 = vmatpush1.msra.mxu0 %v1345
    %1364 = vmatprep.subr.mxu0 0.0
    %1365 = vmatpush1.msra.mxu0 %v1346
    %1366 = vmatprep.subr.mxu0 0.0
    %1367 = vmatpush1.msra.mxu0 0.0
    %1368 = vmatprep.subr.mxu0 0.0
    %1369 = vmatpush1.msra.mxu0 0.0
    %1370 = vmatprep.subr.mxu0 0.0
    %1371 = vmatpush1.msra.mxu0 0.0
    %1372 = vmatprep.subr.mxu0 0.0
    %1373 = vmatpush1.msra.mxu0 0.0
    %1374 = vmatprep.subr.mxu0 0.0
    %1375 = vmatpush1.msra.mxu0 0.0
    %1376 = vmatprep.subr.mxu0 0.0
    %1377 = vmatpush1.msra.mxu0 0.0
    %1378 = vmatprep.subr.mxu0 0.0
    %1379 = vmatpush1.msra.mxu0 0.0
    %1380 = vmatprep.subr.mxu0 0.0
    %1381 = vmatpush1.msra.mxu0 0.0
    %1382 = vmatprep.subr.mxu0 0.0
    %1383 = vmatpush1.msra.mxu0 0.0
    %1384 = vmatprep.subr.mxu0 0.0
    %1385 = vmatpush1.msra.mxu0 0.0
    %1386 = vmatprep.subr.mxu0 0.0
    %1387 = vmatpush1.msra.mxu0 0.0
    %1388 = vmatprep.subr.mxu0 0.0
    %1389 = vmatpush1.msra.mxu0 0.0
    %1390 = vmatprep.subr.mxu0 0.0
    %1391 = vmatpush1.msra.mxu0 0.0
    %1392 = vmatprep.subr.mxu0 0.0
    %1393 = vmatpush1.msra.mxu0 0.0
    %1394 = vmatprep.subr.mxu0 0.0
    %1395 = vmatpush1.msra.mxu0 0.0
    %1396 = vmatprep.subr.mxu0 0.0
    %1397 = vmatpush1.msra.mxu0 0.0
    %1398 = vmatprep.subr.mxu0 0.0
    %1399 = vmatpush1.msra.mxu0 0.0
    %1400 = vmatprep.subr.mxu0 0.0
    %1401 = vmatpush1.msra.mxu0 0.0
    %1402 = vmatprep.subr.mxu0 0.0
    %1403 = vmatpush1.msra.mxu0 0.0
    %1404 = vmatprep.subr.mxu0 0.0
    %1405 = vmatpush1.msra.mxu0 0.0
    %1406 = vmatprep.subr.mxu0 0.0
    %1407 = vmatpush1.msra.mxu0 0.0
    %1408 = vmatprep.subr.mxu0 0.0
    %1409 = vmatpush1.msra.mxu0 0.0
    %1410 = vmatprep.subr.mxu0 0.0
    %1411 = vmatpush1.msra.mxu0 0.0
    %1412 = vmatprep.subr.mxu0 0.0
    %1413 = vmatpush1.msra.mxu0 0.0
    %1414 = vmatprep.mubr.f32.mxu0 0.0
    %1415 = vmatmul.mubr.f32.gmra.mrb[0].mxu0 %v1348
    %v1416 = vpop.f32.mrb[0].mxu0
    %v1417 = vadd.f32 0.0, %v1416
    %v1418 = vpop.f32.mrb[0].mxu0
    %1419 = vdwg.mxu0
    %v1420 = vadd.f32 %v1260, %v1417
    %s1421 = scalar_lea.vmem %s5, 24
    %v1422 = vld [vmem:[%s1421] sm:$0xff]
    %v1424 = vsel %vm893, %v1422, 0
    %1426 = vmatprep.subr.mxu0 0.0
    %1427 = vmatpush1.msra.mxu0 %v949
    %1428 = vmatprep.subr.mxu0 0.0
    %1429 = vmatpush1.msra.mxu0 %v950
    %1430 = vmatprep.subr.mxu0 0.0
    %1431 = vmatpush1.msra.mxu0 0.0
    %1432 = vmatprep.subr.mxu0 0.0
    %1433 = vmatpush1.msra.mxu0 0.0
    %1434 = vmatprep.subr.mxu0 0.0
    %1435 = vmatpush1.msra.mxu0 0.0
    %1436 = vmatprep.subr.mxu0 0.0
    %1437 = vmatpush1.msra.mxu0 0.0
    %1438 = vmatprep.subr.mxu0 0.0
    %1439 = vmatpush1.msra.mxu0 0.0
    %1440 = vmatprep.subr.mxu0 0.0
    %1441 = vmatpush1.msra.mxu0 0.0
    %1442 = vmatprep.subr.mxu0 0.0
    %1443 = vmatpush1.msra.mxu0 0.0
    %1444 = vmatprep.subr.mxu0 0.0
    %1445 = vmatpush1.msra.mxu0 0.0
    %1446 = vmatprep.subr.mxu0 0.0
    %1447 = vmatpush1.msra.mxu0 0.0
    %1448 = vmatprep.subr.mxu0 0.0
    %1449 = vmatpush1.msra.mxu0 0.0
    %1450 = vmatprep.subr.mxu0 0.0
    %1451 = vmatpush1.msra.mxu0 0.0
    %1452 = vmatprep.subr.mxu0 0.0
    %1453 = vmatpush1.msra.mxu0 0.0
    %1454 = vmatprep.subr.mxu0 0.0
    %1455 = vmatpush1.msra.mxu0 0.0
    %1456 = vmatprep.subr.mxu0 0.0
    %1457 = vmatpush1.msra.mxu0 0.0
    %1458 = vmatprep.subr.mxu0 0.0
    %1459 = vmatpush1.msra.mxu0 0.0
    %1460 = vmatprep.subr.mxu0 0.0
    %1461 = vmatpush1.msra.mxu0 0.0
    %1462 = vmatprep.subr.mxu0 0.0
    %1463 = vmatpush1.msra.mxu0 0.0
    %1464 = vmatprep.subr.mxu0 0.0
    %1465 = vmatpush1.msra.mxu0 0.0
    %1466 = vmatprep.subr.mxu0 0.0
    %1467 = vmatpush1.msra.mxu0 0.0
    %1468 = vmatprep.subr.mxu0 0.0
    %1469 = vmatpush1.msra.mxu0 0.0
    %1470 = vmatprep.subr.mxu0 0.0
    %1471 = vmatpush1.msra.mxu0 0.0
    %1472 = vmatprep.subr.mxu0 0.0
    %1473 = vmatpush1.msra.mxu0 0.0
    %1474 = vmatprep.subr.mxu0 0.0
    %1475 = vmatpush1.msra.mxu0 0.0
    %1476 = vmatprep.subr.mxu0 0.0
    %1477 = vmatpush1.msra.mxu0 0.0
    %1478 = vmatprep.subr.mxu0 0.0
    %1479 = vmatpush1.msra.mxu0 0.0
    %1480 = vmatprep.subr.mxu0 0.0
    %1481 = vmatpush1.msra.mxu0 0.0
    %1482 = vmatprep.subr.mxu0 0.0
    %1483 = vmatpush1.msra.mxu0 0.0
    %1484 = vmatprep.subr.mxu0 0.0
    %1485 = vmatpush1.msra.mxu0 0.0
    %1486 = vmatprep.subr.mxu0 0.0
    %1487 = vmatpush1.msra.mxu0 0.0
    %1488 = vmatprep.subr.mxu0 0.0
    %1489 = vmatpush1.msra.mxu0 0.0
    %1490 = vmatprep.mubr.f32.mxu0 0.0
    %1491 = vmatmul.mubr.f32.gmra.mrb[0].mxu0 %v1424
    %v1492 = vpop.f32.mrb[0].mxu0
    %v1493 = vadd.f32 0.0, %v1492
    %v1494 = vpop.f32.mrb[0].mxu0
    %1495 = vdwg.mxu0
    %s1496 = scalar_lea.vmem %s6, 192
    %v1497 = vld [vmem:[%s1496] sm:$0xff]
    %v1498 = vld [vmem:[%s1496 + $0x8] sm:$0xff]
    %v1499 = vld [vmem:[%s1496 + $0x10] sm:$0xff]
    %v1500 = vld [vmem:[%s1496 + $0x18] sm:$0xff]
    %v1501 = vld [vmem:[%s1496 + $0x20] sm:$0xff]
    %v1502 = vld [vmem:[%s1496 + $0x28] sm:$0xff]
    %v1503 = vld [vmem:[%s1496 + $0x30] sm:$0xff]
    %v1504 = vld [vmem:[%s1496 + $0x38] sm:$0xff]
    %v1506 = vsel %vm261, %v1493, 0
    %1508 = vmatprep.subr.mxu0 0.0
    %1509 = vmatpush1.msra.mxu0 %v1497
    %1510 = vmatprep.subr.mxu0 0.0
    %1511 = vmatpush1.msra.mxu0 %v1498
    %1512 = vmatprep.subr.mxu0 0.0
    %1513 = vmatpush1.msra.mxu0 %v1499
    %1514 = vmatprep.subr.mxu0 0.0
    %1515 = vmatpush1.msra.mxu0 %v1500
    %1516 = vmatprep.subr.mxu0 0.0
    %1517 = vmatpush1.msra.mxu0 %v1501
    %1518 = vmatprep.subr.mxu0 0.0
    %1519 = vmatpush1.msra.mxu0 %v1502
    %1520 = vmatprep.subr.mxu0 0.0
    %1521 = vmatpush1.msra.mxu0 %v1503
    %1522 = vmatprep.subr.mxu0 0.0
    %1523 = vmatpush1.msra.mxu0 %v1504
    %1524 = vmatprep.subr.mxu0 0.0
    %1525 = vmatpush1.msra.mxu0 0.0
    %1526 = vmatprep.subr.mxu0 0.0
    %1527 = vmatpush1.msra.mxu0 0.0
    %1528 = vmatprep.subr.mxu0 0.0
    %1529 = vmatpush1.msra.mxu0 0.0
    %1530 = vmatprep.subr.mxu0 0.0
    %1531 = vmatpush1.msra.mxu0 0.0
    %1532 = vmatprep.subr.mxu0 0.0
    %1533 = vmatpush1.msra.mxu0 0.0
    %1534 = vmatprep.subr.mxu0 0.0
    %1535 = vmatpush1.msra.mxu0 0.0
    %1536 = vmatprep.subr.mxu0 0.0
    %1537 = vmatpush1.msra.mxu0 0.0
    %1538 = vmatprep.subr.mxu0 0.0
    %1539 = vmatpush1.msra.mxu0 0.0
    %1540 = vmatprep.subr.mxu0 0.0
    %1541 = vmatpush1.msra.mxu0 0.0
    %1542 = vmatprep.subr.mxu0 0.0
    %1543 = vmatpush1.msra.mxu0 0.0
    %1544 = vmatprep.subr.mxu0 0.0
    %1545 = vmatpush1.msra.mxu0 0.0
    %1546 = vmatprep.subr.mxu0 0.0
    %1547 = vmatpush1.msra.mxu0 0.0
    %1548 = vmatprep.subr.mxu0 0.0
    %1549 = vmatpush1.msra.mxu0 0.0
    %1550 = vmatprep.subr.mxu0 0.0
    %1551 = vmatpush1.msra.mxu0 0.0
    %1552 = vmatprep.subr.mxu0 0.0
    %1553 = vmatpush1.msra.mxu0 0.0
    %1554 = vmatprep.subr.mxu0 0.0
    %1555 = vmatpush1.msra.mxu0 0.0
    %1556 = vmatprep.subr.mxu0 0.0
    %1557 = vmatpush1.msra.mxu0 0.0
    %1558 = vmatprep.subr.mxu0 0.0
    %1559 = vmatpush1.msra.mxu0 0.0
    %1560 = vmatprep.subr.mxu0 0.0
    %1561 = vmatpush1.msra.mxu0 0.0
    %1562 = vmatprep.subr.mxu0 0.0
    %1563 = vmatpush1.msra.mxu0 0.0
    %1564 = vmatprep.subr.mxu0 0.0
    %1565 = vmatpush1.msra.mxu0 0.0
    %1566 = vmatprep.subr.mxu0 0.0
    %1567 = vmatpush1.msra.mxu0 0.0
    %1568 = vmatprep.subr.mxu0 0.0
    %1569 = vmatpush1.msra.mxu0 0.0
    %1570 = vmatprep.subr.mxu0 0.0
    %1571 = vmatpush1.msra.mxu0 0.0
    %1572 = vmatprep.mubr.f32.mxu0 0.0
    %1573 = vmatmul.mubr.f32.gmra.mrb[0].mxu0 %v1506
    %v1574 = vpop.f32.mrb[0].mxu0
    %v1575 = vadd.f32 0.0, %v1574
    %v1576 = vpop.f32.mrb[0].mxu0
    %1577 = vdwg.mxu0
    %v1578 = vadd.f32 %v1420, %v1575
    %v1579 = vsel %vm261, %v1578, 0.0
    %v1580 = vrot.slane %v1579, 4
    %v1581 = vadd.f32 %v1579, %v1580
    %v1582 = vrot.slane %v1581, 2
    %v1583 = vadd.f32 %v1581, %v1582
    %v1584 = vrot.slane %v1583, 1
    %v1585 = vadd.f32 %v1583, %v1584
    %v1586 = vmul.f32 %v1578, %v1578
    %v1587 = vsel %vm261, %v1586, 0.0
    %v1588 = vrot.slane %v1587, 4
    %v1589 = vadd.f32 %v1587, %v1588
    %v1590 = vrot.slane %v1589, 2
    %v1591 = vadd.f32 %v1589, %v1590
    %v1592 = vrot.slane %v1591, 1
    %v1593 = vadd.f32 %v1591, %v1592
    %1595 = vrot.lane.b32.xlu0 %v1585, 112
    %v1596 = vpop.permute.xlu0 %1595
    %v1598 = vadd.f32 %v1585, %v1596
    %1600 = vrot.lane.b32.xlu0 %v1593, 112
    %v1601 = vpop.permute.xlu0 %1600
    %v1603 = vadd.f32 %v1593, %v1601
    %1604 = vrot.lane.b32.xlu0 %v1585, 96
    %v1605 = vpop.permute.xlu0 %1604
    %v1607 = vadd.f32 %v1598, %v1605
    %1608 = vrot.lane.b32.xlu0 %v1593, 96
    %v1609 = vpop.permute.xlu0 %1608
    %v1611 = vadd.f32 %v1603, %v1609
    %1612 = vrot.lane.b32.xlu0 %v1585, 80
    %v1613 = vpop.permute.xlu0 %1612
    %v1615 = vadd.f32 %v1607, %v1613
    %1616 = vrot.lane.b32.xlu0 %v1593, 80
    %v1617 = vpop.permute.xlu0 %1616
    %v1619 = vadd.f32 %v1611, %v1617
    %v1620 = vmul.f32 %v1615, 0.03125
    %v1621 = vmul.f32 %v1619, 0.03125
    %v1622 = vmul.f32 %v1620, %v1620
    %v1623 = vsub.f32 %v1621, %v1622
    %v1624 = vld [vmem:[%s7] sm:$0x1]
    %v1625 = vadd.f32 %v1623, 1e-05
    %v1626 = vrsqrt.pop %v1625
    %v1627 = vmul.f32 %v1624, %v1626
    %v1628 = vld [vmem:[%s8] sm:$0x1]
    %v1629 = vmul.f32 %v1620, %v1627
    %v1630 = vsub.f32 %v1628, %v1629
    %v1632 = vlaneseq
    %v1633 = vshrl.u32 %v1632, 7
    %v1634 = vsub.s32 0, %v1633
    %v1635 = vrot.slane %v1627, %v1634
    %1636 = vrot.lane.b32.xlu0 %v1635, 16
    %v1637 = vpop.permute.xlu0 %1636
    %1639 = vrot.lane.b32.xlu0 %v1635, 32
    %v1640 = vpop.permute.xlu0 %1639
    %1642 = vrot.lane.b32.xlu0 %v1635, 48
    %v1643 = vpop.permute.xlu0 %1642
    %v1645 = vsel %vm893, %v1627, %v1637
    %v1646 = vsel %vm78, %v1645, %v1640
    %v1647 = vsel %vm900, %v1646, %v1643
    %v1649 = vlaneseq
    %v1650 = vshrl.u32 %v1649, 7
    %v1651 = vsub.s32 0, %v1650
    %v1652 = vrot.slane %v1630, %v1651
    %1653 = vrot.lane.b32.xlu0 %v1652, 16
    %v1654 = vpop.permute.xlu0 %1653
    %1656 = vrot.lane.b32.xlu0 %v1652, 32
    %v1657 = vpop.permute.xlu0 %1656
    %1659 = vrot.lane.b32.xlu0 %v1652, 48
    %v1660 = vpop.permute.xlu0 %1659
    %v1662 = vsel %vm893, %v1630, %v1654
    %v1663 = vsel %vm78, %v1662, %v1657
    %v1664 = vsel %vm900, %v1663, %v1660
    %v1665 = vlaneseq
    %v1666 = vshrl.u32 %v1665, 7
    %v1667 = vsub.s32 0, %v1666
    %v1668 = vrot.slane %v1647, %v1667
    %v1669 = vmul.f32 %v1578, %v1668
    %v1670 = vlaneseq
    %v1671 = vshrl.u32 %v1670, 7
    %v1672 = vsub.s32 0, %v1671
    %v1673 = vrot.slane %v1664, %v1672
    %v1674 = vadd.f32 %v1669, %v1673
    %v1675 = vmax.f32 %v1674, 0.0
    %v1676 = vld [vmem:[%s9] sm:$0xf]
    %v1678 = vsel %vm891, %v1676, 0
    %1680 = vmatprep.subr.mxu0 0.0
    %1681 = vmatpush1.msra.mxu0 %v1675
    %1682 = vmatprep.subr.mxu0 0.0
    %1683 = vmatpush1.msra.mxu0 0.0
    %1684 = vmatprep.subr.mxu0 0.0
    %1685 = vmatpush1.msra.mxu0 0.0
    %1686 = vmatprep.subr.mxu0 0.0
    %1687 = vmatpush1.msra.mxu0 0.0
    %1688 = vmatprep.subr.mxu0 0.0
    %1689 = vmatpush1.msra.mxu0 0.0
    %1690 = vmatprep.subr.mxu0 0.0
    %1691 = vmatpush1.msra.mxu0 0.0
    %1692 = vmatprep.subr.mxu0 0.0
    %1693 = vmatpush1.msra.mxu0 0.0
    %1694 = vmatprep.subr.mxu0 0.0
    %1695 = vmatpush1.msra.mxu0 0.0
    %1696 = vmatprep.subr.mxu0 0.0
    %1697 = vmatpush1.msra.mxu0 0.0
    %1698 = vmatprep.subr.mxu0 0.0
    %1699 = vmatpush1.msra.mxu0 0.0
    %1700 = vmatprep.subr.mxu0 0.0
    %1701 = vmatpush1.msra.mxu0 0.0
    %1702 = vmatprep.subr.mxu0 0.0
    %1703 = vmatpush1.msra.mxu0 0.0
    %1704 = vmatprep.subr.mxu0 0.0
    %1705 = vmatpush1.msra.mxu0 0.0
    %1706 = vmatprep.subr.mxu0 0.0
    %1707 = vmatpush1.msra.mxu0 0.0
    %1708 = vmatprep.subr.mxu0 0.0
    %1709 = vmatpush1.msra.mxu0 0.0
    %1710 = vmatprep.subr.mxu0 0.0
    %1711 = vmatpush1.msra.mxu0 0.0
    %1712 = vmatprep.subr.mxu0 0.0
    %1713 = vmatpush1.msra.mxu0 0.0
    %1714 = vmatprep.subr.mxu0 0.0
    %1715 = vmatpush1.msra.mxu0 0.0
    %1716 = vmatprep.subr.mxu0 0.0
    %1717 = vmatpush1.msra.mxu0 0.0
    %1718 = vmatprep.subr.mxu0 0.0
    %1719 = vmatpush1.msra.mxu0 0.0
    %1720 = vmatprep.subr.mxu0 0.0
    %1721 = vmatpush1.msra.mxu0 0.0
    %1722 = vmatprep.subr.mxu0 0.0
    %1723 = vmatpush1.msra.mxu0 0.0
    %1724 = vmatprep.subr.mxu0 0.0
    %1725 = vmatpush1.msra.mxu0 0.0
    %1726 = vmatprep.subr.mxu0 0.0
    %1727 = vmatpush1.msra.mxu0 0.0
    %1728 = vmatprep.subr.mxu0 0.0
    %1729 = vmatpush1.msra.mxu0 0.0
    %1730 = vmatprep.subr.mxu0 0.0
    %1731 = vmatpush1.msra.mxu0 0.0
    %1732 = vmatprep.subr.mxu0 0.0
    %1733 = vmatpush1.msra.mxu0 0.0
    %1734 = vmatprep.subr.mxu0 0.0
    %1735 = vmatpush1.msra.mxu0 0.0
    %1736 = vmatprep.subr.mxu0 0.0
    %1737 = vmatpush1.msra.mxu0 0.0
    %1738 = vmatprep.subr.mxu0 0.0
    %1739 = vmatpush1.msra.mxu0 0.0
    %1740 = vmatprep.subr.mxu0 0.0
    %1741 = vmatpush1.msra.mxu0 0.0
    %1742 = vmatprep.subr.mxu0 0.0
    %1743 = vmatpush1.msra.mxu0 0.0
    %1744 = vmatprep.mubr.f32.mxu0 0.0
    %1745 = vmatmul.mubr.f32.gmra.mrb[0].mxu0 %v1678
    %v1746 = vpop.f32.mrb[0].mxu0
    %v1747 = vadd.f32 0.0, %v1746
    %v1748 = vpop.f32.mrb[0].mxu0
    %1749 = vdwg.mxu0
    %v1750 = vld [vmem:[#allocation4] sm:$0xff]
    %v1751 = vld [vmem:[#allocation4 + $0x8] sm:$0xff]
    %v1752 = vld [vmem:[#allocation4 + $0x10] sm:$0xff]
    %v1753 = vld [vmem:[#allocation4 + $0x18] sm:$0xff]
    %v1754 = vld [vmem:[#allocation4 + $0x20] sm:$0xff]
    %v1755 = vld [vmem:[#allocation4 + $0x28] sm:$0xff]
    %v1756 = vld [vmem:[#allocation4 + $0x30] sm:$0xff]
    %v1757 = vld [vmem:[#allocation4 + $0x38] sm:$0xff]
    %s1758 = scalar_lea.vmem %s9, 4
    %v1759 = vld [vmem:[%s1758] sm:$0xf]
    %v1761 = vsel %vm891, %v1759, 0
    %1763 = vmatprep.subr.mxu0 0.0
    %1764 = vmatpush1.msra.mxu0 %v1675
    %1765 = vmatprep.subr.mxu0 0.0
    %1766 = vmatpush1.msra.mxu0 0.0
    %1767 = vmatprep.subr.mxu0 0.0
    %1768 = vmatpush1.msra.mxu0 0.0
    %1769 = vmatprep.subr.mxu0 0.0
    %1770 = vmatpush1.msra.mxu0 0.0
    %1771 = vmatprep.subr.mxu0 0.0
    %1772 = vmatpush1.msra.mxu0 0.0
    %1773 = vmatprep.subr.mxu0 0.0
    %1774 = vmatpush1.msra.mxu0 0.0
    %1775 = vmatprep.subr.mxu0 0.0
    %1776 = vmatpush1.msra.mxu0 0.0
    %1777 = vmatprep.subr.mxu0 0.0
    %1778 = vmatpush1.msra.mxu0 0.0
    %1779 = vmatprep.subr.mxu0 0.0
    %1780 = vmatpush1.msra.mxu0 0.0
    %1781 = vmatprep.subr.mxu0 0.0
    %1782 = vmatpush1.msra.mxu0 0.0
    %1783 = vmatprep.subr.mxu0 0.0
    %1784 = vmatpush1.msra.mxu0 0.0
    %1785 = vmatprep.subr.mxu0 0.0
    %1786 = vmatpush1.msra.mxu0 0.0
    %1787 = vmatprep.subr.mxu0 0.0
    %1788 = vmatpush1.msra.mxu0 0.0
    %1789 = vmatprep.subr.mxu0 0.0
    %1790 = vmatpush1.msra.mxu0 0.0
    %1791 = vmatprep.subr.mxu0 0.0
    %1792 = vmatpush1.msra.mxu0 0.0
    %1793 = vmatprep.subr.mxu0 0.0
    %1794 = vmatpush1.msra.mxu0 0.0
    %1795 = vmatprep.subr.mxu0 0.0
    %1796 = vmatpush1.msra.mxu0 0.0
    %1797 = vmatprep.subr.mxu0 0.0
    %1798 = vmatpush1.msra.mxu0 0.0
    %1799 = vmatprep.subr.mxu0 0.0
    %1800 = vmatpush1.msra.mxu0 0.0
    %1801 = vmatprep.subr.mxu0 0.0
    %1802 = vmatpush1.msra.mxu0 0.0
    %1803 = vmatprep.subr.mxu0 0.0
    %1804 = vmatpush1.msra.mxu0 0.0
    %1805 = vmatprep.subr.mxu0 0.0
    %1806 = vmatpush1.msra.mxu0 0.0
    %1807 = vmatprep.subr.mxu0 0.0
    %1808 = vmatpush1.msra.mxu0 0.0
    %1809 = vmatprep.subr.mxu0 0.0
    %1810 = vmatpush1.msra.mxu0 0.0
    %1811 = vmatprep.subr.mxu0 0.0
    %1812 = vmatpush1.msra.mxu0 0.0
    %1813 = vmatprep.subr.mxu0 0.0
    %1814 = vmatpush1.msra.mxu0 0.0
    %1815 = vmatprep.subr.mxu0 0.0
    %1816 = vmatpush1.msra.mxu0 0.0
    %1817 = vmatprep.subr.mxu0 0.0
    %1818 = vmatpush1.msra.mxu0 0.0
    %1819 = vmatprep.subr.mxu0 0.0
    %1820 = vmatpush1.msra.mxu0 0.0
    %1821 = vmatprep.subr.mxu0 0.0
    %1822 = vmatpush1.msra.mxu0 0.0
    %1823 = vmatprep.subr.mxu0 0.0
    %1824 = vmatpush1.msra.mxu0 0.0
    %1825 = vmatprep.subr.mxu0 0.0
    %1826 = vmatpush1.msra.mxu0 0.0
    %1827 = vmatprep.mubr.f32.mxu0 0.0
    %1828 = vmatmul.mubr.f32.gmra.mrb[0].mxu0 %v1761
    %v1829 = vpop.f32.mrb[0].mxu0
    %v1830 = vadd.f32 0.0, %v1829
    %v1831 = vpop.f32.mrb[0].mxu0
    %1832 = vdwg.mxu0
    %s1833 = scalar_lea.vmem [#allocation4], 64
    %v1834 = vld [vmem:[%s1833] sm:$0xff]
    %v1835 = vld [vmem:[%s1833 + $0x8] sm:$0xff]
    %v1836 = vld [vmem:[%s1833 + $0x10] sm:$0xff]
    %v1837 = vld [vmem:[%s1833 + $0x18] sm:$0xff]
    %v1838 = vld [vmem:[%s1833 + $0x20] sm:$0xff]
    %v1839 = vld [vmem:[%s1833 + $0x28] sm:$0xff]
    %v1840 = vld [vmem:[%s1833 + $0x30] sm:$0xff]
    %v1841 = vld [vmem:[%s1833 + $0x38] sm:$0xff]
    %v1843 = vsel %vm261, %v1830, 0
    %1845 = vmatprep.subr.mxu0 0.0
    %1846 = vmatpush1.msra.mxu0 %v1834
    %1847 = vmatprep.subr.mxu0 0.0
    %1848 = vmatpush1.msra.mxu0 %v1835
    %1849 = vmatprep.subr.mxu0 0.0
    %1850 = vmatpush1.msra.mxu0 %v1836
    %1851 = vmatprep.subr.mxu0 0.0
    %1852 = vmatpush1.msra.mxu0 %v1837
    %1853 = vmatprep.subr.mxu0 0.0
    %1854 = vmatpush1.msra.mxu0 %v1838
    %1855 = vmatprep.subr.mxu0 0.0
    %1856 = vmatpush1.msra.mxu0 %v1839
    %1857 = vmatprep.subr.mxu0 0.0
    %1858 = vmatpush1.msra.mxu0 %v1840
    %1859 = vmatprep.subr.mxu0 0.0
    %1860 = vmatpush1.msra.mxu0 %v1841
    %1861 = vmatprep.subr.mxu0 0.0
    %1862 = vmatpush1.msra.mxu0 0.0
    %1863 = vmatprep.subr.mxu0 0.0
    %1864 = vmatpush1.msra.mxu0 0.0
    %1865 = vmatprep.subr.mxu0 0.0
    %1866 = vmatpush1.msra.mxu0 0.0
    %1867 = vmatprep.subr.mxu0 0.0
    %1868 = vmatpush1.msra.mxu0 0.0
    %1869 = vmatprep.subr.mxu0 0.0
    %1870 = vmatpush1.msra.mxu0 0.0
    %1871 = vmatprep.subr.mxu0 0.0
    %1872 = vmatpush1.msra.mxu0 0.0
    %1873 = vmatprep.subr.mxu0 0.0
    %1874 = vmatpush1.msra.mxu0 0.0
    %1875 = vmatprep.subr.mxu0 0.0
    %1876 = vmatpush1.msra.mxu0 0.0
    %1877 = vmatprep.subr.mxu0 0.0
    %1878 = vmatpush1.msra.mxu0 0.0
    %1879 = vmatprep.subr.mxu0 0.0
    %1880 = vmatpush1.msra.mxu0 0.0
    %1881 = vmatprep.subr.mxu0 0.0
    %1882 = vmatpush1.msra.mxu0 0.0
    %1883 = vmatprep.subr.mxu0 0.0
    %1884 = vmatpush1.msra.mxu0 0.0
    %1885 = vmatprep.subr.mxu0 0.0
    %1886 = vmatpush1.msra.mxu0 0.0
    %1887 = vmatprep.subr.mxu0 0.0
    %1888 = vmatpush1.msra.mxu0 0.0
    %1889 = vmatprep.subr.mxu0 0.0
    %1890 = vmatpush1.msra.mxu0 0.0
    %1891 = vmatprep.subr.mxu0 0.0
    %1892 = vmatpush1.msra.mxu0 0.0
    %1893 = vmatprep.subr.mxu0 0.0
    %1894 = vmatpush1.msra.mxu0 0.0
    %1895 = vmatprep.subr.mxu0 0.0
    %1896 = vmatpush1.msra.mxu0 0.0
    %1897 = vmatprep.subr.mxu0 0.0
    %1898 = vmatpush1.msra.mxu0 0.0
    %1899 = vmatprep.subr.mxu0 0.0
    %1900 = vmatpush1.msra.mxu0 0.0
    %1901 = vmatprep.subr.mxu0 0.0
    %1902 = vmatpush1.msra.mxu0 0.0
    %1903 = vmatprep.subr.mxu0 0.0
    %1904 = vmatpush1.msra.mxu0 0.0
    %1905 = vmatprep.subr.mxu0 0.0
    %1906 = vmatpush1.msra.mxu0 0.0
    %1907 = vmatprep.subr.mxu0 0.0
    %1908 = vmatpush1.msra.mxu0 0.0
    %1909 = vmatprep.mubr.f32.mxu0 0.0
    %1910 = vmatmul.mubr.f32.gmra.mrb[0].mxu0 %v1843
    %v1911 = vpop.f32.mrb[0].mxu0
    %v1912 = vadd.f32 0.0, %v1911
    %v1913 = vpop.f32.mrb[0].mxu0
    %1914 = vdwg.mxu0
    %v1916 = vsel %vm261, %v1747, 0
    %1918 = vmatprep.subr.mxu0 0.0
    %1919 = vmatpush1.msra.mxu0 %v1750
    %1920 = vmatprep.subr.mxu0 0.0
    %1921 = vmatpush1.msra.mxu0 %v1751
    %1922 = vmatprep.subr.mxu0 0.0
    %1923 = vmatpush1.msra.mxu0 %v1752
    %1924 = vmatprep.subr.mxu0 0.0
    %1925 = vmatpush1.msra.mxu0 %v1753
    %1926 = vmatprep.subr.mxu0 0.0
    %1927 = vmatpush1.msra.mxu0 %v1754
    %1928 = vmatprep.subr.mxu0 0.0
    %1929 = vmatpush1.msra.mxu0 %v1755
    %1930 = vmatprep.subr.mxu0 0.0
    %1931 = vmatpush1.msra.mxu0 %v1756
    %1932 = vmatprep.subr.mxu0 0.0
    %1933 = vmatpush1.msra.mxu0 %v1757
    %1934 = vmatprep.subr.mxu0 0.0
    %1935 = vmatpush1.msra.mxu0 0.0
    %1936 = vmatprep.subr.mxu0 0.0
    %1937 = vmatpush1.msra.mxu0 0.0
    %1938 = vmatprep.subr.mxu0 0.0
    %1939 = vmatpush1.msra.mxu0 0.0
    %1940 = vmatprep.subr.mxu0 0.0
    %1941 = vmatpush1.msra.mxu0 0.0
    %1942 = vmatprep.subr.mxu0 0.0
    %1943 = vmatpush1.msra.mxu0 0.0
    %1944 = vmatprep.subr.mxu0 0.0
    %1945 = vmatpush1.msra.mxu0 0.0
    %1946 = vmatprep.subr.mxu0 0.0
    %1947 = vmatpush1.msra.mxu0 0.0
    %1948 = vmatprep.subr.mxu0 0.0
    %1949 = vmatpush1.msra.mxu0 0.0
    %1950 = vmatprep.subr.mxu0 0.0
    %1951 = vmatpush1.msra.mxu0 0.0
    %1952 = vmatprep.subr.mxu0 0.0
    %1953 = vmatpush1.msra.mxu0 0.0
    %1954 = vmatprep.subr.mxu0 0.0
    %1955 = vmatpush1.msra.mxu0 0.0
    %1956 = vmatprep.subr.mxu0 0.0
    %1957 = vmatpush1.msra.mxu0 0.0
    %1958 = vmatprep.subr.mxu0 0.0
    %1959 = vmatpush1.msra.mxu0 0.0
    %1960 = vmatprep.subr.mxu0 0.0
    %1961 = vmatpush1.msra.mxu0 0.0
    %1962 = vmatprep.subr.mxu0 0.0
    %1963 = vmatpush1.msra.mxu0 0.0
    %1964 = vmatprep.subr.mxu0 0.0
    %1965 = vmatpush1.msra.mxu0 0.0
    %1966 = vmatprep.subr.mxu0 0.0
    %1967 = vmatpush1.msra.mxu0 0.0
    %1968 = vmatprep.subr.mxu0 0.0
    %1969 = vmatpush1.msra.mxu0 0.0
    %1970 = vmatprep.subr.mxu0 0.0
    %1971 = vmatpush1.msra.mxu0 0.0
    %1972 = vmatprep.subr.mxu0 0.0
    %1973 = vmatpush1.msra.mxu0 0.0
    %1974 = vmatprep.subr.mxu0 0.0
    %1975 = vmatpush1.msra.mxu0 0.0
    %1976 = vmatprep.subr.mxu0 0.0
    %1977 = vmatpush1.msra.mxu0 0.0
    %1978 = vmatprep.subr.mxu0 0.0
    %1979 = vmatpush1.msra.mxu0 0.0
    %1980 = vmatprep.subr.mxu0 0.0
    %1981 = vmatpush1.msra.mxu0 0.0
    %1982 = vmatprep.mubr.f32.mxu0 0.0
    %1983 = vmatmul.mubr.f32.gmra.mrb[0].mxu0 %v1916
    %v1984 = vpop.f32.mrb[0].mxu0
    %v1985 = vadd.f32 %v1912, %v1984
    %v1986 = vpop.f32.mrb[0].mxu0
    %1987 = vdwg.mxu0
    %s1988 = scalar_lea.vmem %s9, 8
    %v1989 = vld [vmem:[%s1988] sm:$0xf]
    %v1991 = vsel %vm891, %v1989, 0
    %1993 = vmatprep.subr.mxu0 0.0
    %1994 = vmatpush1.msra.mxu0 %v1675
    %1995 = vmatprep.subr.mxu0 0.0
    %1996 = vmatpush1.msra.mxu0 0.0
    %1997 = vmatprep.subr.mxu0 0.0
    %1998 = vmatpush1.msra.mxu0 0.0
    %1999 = vmatprep.subr.mxu0 0.0
    %2000 = vmatpush1.msra.mxu0 0.0
    %2001 = vmatprep.subr.mxu0 0.0
    %2002 = vmatpush1.msra.mxu0 0.0
    %2003 = vmatprep.subr.mxu0 0.0
    %2004 = vmatpush1.msra.mxu0 0.0
    %2005 = vmatprep.subr.mxu0 0.0
    %2006 = vmatpush1.msra.mxu0 0.0
    %2007 = vmatprep.subr.mxu0 0.0
    %2008 = vmatpush1.msra.mxu0 0.0
    %2009 = vmatprep.subr.mxu0 0.0
    %2010 = vmatpush1.msra.mxu0 0.0
    %2011 = vmatprep.subr.mxu0 0.0
    %2012 = vmatpush1.msra.mxu0 0.0
    %2013 = vmatprep.subr.mxu0 0.0
    %2014 = vmatpush1.msra.mxu0 0.0
    %2015 = vmatprep.subr.mxu0 0.0
    %2016 = vmatpush1.msra.mxu0 0.0
    %2017 = vmatprep.subr.mxu0 0.0
    %2018 = vmatpush1.msra.mxu0 0.0
    %2019 = vmatprep.subr.mxu0 0.0
    %2020 = vmatpush1.msra.mxu0 0.0
    %2021 = vmatprep.subr.mxu0 0.0
    %2022 = vmatpush1.msra.mxu0 0.0
    %2023 = vmatprep.subr.mxu0 0.0
    %2024 = vmatpush1.msra.mxu0 0.0
    %2025 = vmatprep.subr.mxu0 0.0
    %2026 = vmatpush1.msra.mxu0 0.0
    %2027 = vmatprep.subr.mxu0 0.0
    %2028 = vmatpush1.msra.mxu0 0.0
    %2029 = vmatprep.subr.mxu0 0.0
    %2030 = vmatpush1.msra.mxu0 0.0
    %2031 = vmatprep.subr.mxu0 0.0
    %2032 = vmatpush1.msra.mxu0 0.0
    %2033 = vmatprep.subr.mxu0 0.0
    %2034 = vmatpush1.msra.mxu0 0.0
    %2035 = vmatprep.subr.mxu0 0.0
    %2036 = vmatpush1.msra.mxu0 0.0
    %2037 = vmatprep.subr.mxu0 0.0
    %2038 = vmatpush1.msra.mxu0 0.0
    %2039 = vmatprep.subr.mxu0 0.0
    %2040 = vmatpush1.msra.mxu0 0.0
    %2041 = vmatprep.subr.mxu0 0.0
    %2042 = vmatpush1.msra.mxu0 0.0
    %2043 = vmatprep.subr.mxu0 0.0
    %2044 = vmatpush1.msra.mxu0 0.0
    %2045 = vmatprep.subr.mxu0 0.0
    %2046 = vmatpush1.msra.mxu0 0.0
    %2047 = vmatprep.subr.mxu0 0.0
    %2048 = vmatpush1.msra.mxu0 0.0
    %2049 = vmatprep.subr.mxu0 0.0
    %2050 = vmatpush1.msra.mxu0 0.0
    %2051 = vmatprep.subr.mxu0 0.0
    %2052 = vmatpush1.msra.mxu0 0.0
    %2053 = vmatprep.subr.mxu0 0.0
    %2054 = vmatpush1.msra.mxu0 0.0
    %2055 = vmatprep.subr.mxu0 0.0
    %2056 = vmatpush1.msra.mxu0 0.0
    %2057 = vmatprep.mubr.f32.mxu0 0.0
    %2058 = vmatmul.mubr.f32.gmra.mrb[0].mxu0 %v1991
    %v2059 = vpop.f32.mrb[0].mxu0
    %v2060 = vadd.f32 0.0, %v2059
    %v2061 = vpop.f32.mrb[0].mxu0
    %2062 = vdwg.mxu0
    %s2063 = scalar_lea.vmem [#allocation4], 128
    %v2064 = vld [vmem:[%s2063] sm:$0xff]
    %v2065 = vld [vmem:[%s2063 + $0x8] sm:$0xff]
    %v2066 = vld [vmem:[%s2063 + $0x10] sm:$0xff]
    %v2067 = vld [vmem:[%s2063 + $0x18] sm:$0xff]
    %v2068 = vld [vmem:[%s2063 + $0x20] sm:$0xff]
    %v2069 = vld [vmem:[%s2063 + $0x28] sm:$0xff]
    %v2070 = vld [vmem:[%s2063 + $0x30] sm:$0xff]
    %v2071 = vld [vmem:[%s2063 + $0x38] sm:$0xff]
    %v2073 = vsel %vm261, %v2060, 0
    %2075 = vmatprep.subr.mxu0 0.0
    %2076 = vmatpush1.msra.mxu0 %v2064
    %2077 = vmatprep.subr.mxu0 0.0
    %2078 = vmatpush1.msra.mxu0 %v2065
    %2079 = vmatprep.subr.mxu0 0.0
    %2080 = vmatpush1.msra.mxu0 %v2066
    %2081 = vmatprep.subr.mxu0 0.0
    %2082 = vmatpush1.msra.mxu0 %v2067
    %2083 = vmatprep.subr.mxu0 0.0
    %2084 = vmatpush1.msra.mxu0 %v2068
    %2085 = vmatprep.subr.mxu0 0.0
    %2086 = vmatpush1.msra.mxu0 %v2069
    %2087 = vmatprep.subr.mxu0 0.0
    %2088 = vmatpush1.msra.mxu0 %v2070
    %2089 = vmatprep.subr.mxu0 0.0
    %2090 = vmatpush1.msra.mxu0 %v2071
    %2091 = vmatprep.subr.mxu0 0.0
    %2092 = vmatpush1.msra.mxu0 0.0
    %2093 = vmatprep.subr.mxu0 0.0
    %2094 = vmatpush1.msra.mxu0 0.0
    %2095 = vmatprep.subr.mxu0 0.0
    %2096 = vmatpush1.msra.mxu0 0.0
    %2097 = vmatprep.subr.mxu0 0.0
    %2098 = vmatpush1.msra.mxu0 0.0
    %2099 = vmatprep.subr.mxu0 0.0
    %2100 = vmatpush1.msra.mxu0 0.0
    %2101 = vmatprep.subr.mxu0 0.0
    %2102 = vmatpush1.msra.mxu0 0.0
    %2103 = vmatprep.subr.mxu0 0.0
    %2104 = vmatpush1.msra.mxu0 0.0
    %2105 = vmatprep.subr.mxu0 0.0
    %2106 = vmatpush1.msra.mxu0 0.0
    %2107 = vmatprep.subr.mxu0 0.0
    %2108 = vmatpush1.msra.mxu0 0.0
    %2109 = vmatprep.subr.mxu0 0.0
    %2110 = vmatpush1.msra.mxu0 0.0
    %2111 = vmatprep.subr.mxu0 0.0
    %2112 = vmatpush1.msra.mxu0 0.0
    %2113 = vmatprep.subr.mxu0 0.0
    %2114 = vmatpush1.msra.mxu0 0.0
    %2115 = vmatprep.subr.mxu0 0.0
    %2116 = vmatpush1.msra.mxu0 0.0
    %2117 = vmatprep.subr.mxu0 0.0
    %2118 = vmatpush1.msra.mxu0 0.0
    %2119 = vmatprep.subr.mxu0 0.0
    %2120 = vmatpush1.msra.mxu0 0.0
    %2121 = vmatprep.subr.mxu0 0.0
    %2122 = vmatpush1.msra.mxu0 0.0
    %2123 = vmatprep.subr.mxu0 0.0
    %2124 = vmatpush1.msra.mxu0 0.0
    %2125 = vmatprep.subr.mxu0 0.0
    %2126 = vmatpush1.msra.mxu0 0.0
    %2127 = vmatprep.subr.mxu0 0.0
    %2128 = vmatpush1.msra.mxu0 0.0
    %2129 = vmatprep.subr.mxu0 0.0
    %2130 = vmatpush1.msra.mxu0 0.0
    %2131 = vmatprep.subr.mxu0 0.0
    %2132 = vmatpush1.msra.mxu0 0.0
    %2133 = vmatprep.subr.mxu0 0.0
    %2134 = vmatpush1.msra.mxu0 0.0
    %2135 = vmatprep.subr.mxu0 0.0
    %2136 = vmatpush1.msra.mxu0 0.0
    %2137 = vmatprep.subr.mxu0 0.0
    %2138 = vmatpush1.msra.mxu0 0.0
    %2139 = vmatprep.mubr.f32.mxu0 0.0
    %2140 = vmatmul.mubr.f32.gmra.mrb[0].mxu0 %v2073
    %v2141 = vpop.f32.mrb[0].mxu0
    %v2142 = vadd.f32 0.0, %v2141
    %v2143 = vpop.f32.mrb[0].mxu0
    %2144 = vdwg.mxu0
    %v2145 = vadd.f32 %v1985, %v2142
    %s2146 = scalar_lea.vmem %s9, 12
    %v2147 = vld [vmem:[%s2146] sm:$0xf]
    %v2149 = vsel %vm891, %v2147, 0
    %2151 = vmatprep.subr.mxu0 0.0
    %2152 = vmatpush1.msra.mxu0 %v1675
    %2153 = vmatprep.subr.mxu0 0.0
    %2154 = vmatpush1.msra.mxu0 0.0
    %2155 = vmatprep.subr.mxu0 0.0
    %2156 = vmatpush1.msra.mxu0 0.0
    %2157 = vmatprep.subr.mxu0 0.0
    %2158 = vmatpush1.msra.mxu0 0.0
    %2159 = vmatprep.subr.mxu0 0.0
    %2160 = vmatpush1.msra.mxu0 0.0
    %2161 = vmatprep.subr.mxu0 0.0
    %2162 = vmatpush1.msra.mxu0 0.0
    %2163 = vmatprep.subr.mxu0 0.0
    %2164 = vmatpush1.msra.mxu0 0.0
    %2165 = vmatprep.subr.mxu0 0.0
    %2166 = vmatpush1.msra.mxu0 0.0
    %2167 = vmatprep.subr.mxu0 0.0
    %2168 = vmatpush1.msra.mxu0 0.0
    %2169 = vmatprep.subr.mxu0 0.0
    %2170 = vmatpush1.msra.mxu0 0.0
    %2171 = vmatprep.subr.mxu0 0.0
    %2172 = vmatpush1.msra.mxu0 0.0
    %2173 = vmatprep.subr.mxu0 0.0
    %2174 = vmatpush1.msra.mxu0 0.0
    %2175 = vmatprep.subr.mxu0 0.0
    %2176 = vmatpush1.msra.mxu0 0.0
    %2177 = vmatprep.subr.mxu0 0.0
    %2178 = vmatpush1.msra.mxu0 0.0
    %2179 = vmatprep.subr.mxu0 0.0
    %2180 = vmatpush1.msra.mxu0 0.0
    %2181 = vmatprep.subr.mxu0 0.0
    %2182 = vmatpush1.msra.mxu0 0.0
    %2183 = vmatprep.subr.mxu0 0.0
    %2184 = vmatpush1.msra.mxu0 0.0
    %2185 = vmatprep.subr.mxu0 0.0
    %2186 = vmatpush1.msra.mxu0 0.0
    %2187 = vmatprep.subr.mxu0 0.0
    %2188 = vmatpush1.msra.mxu0 0.0
    %2189 = vmatprep.subr.mxu0 0.0
    %2190 = vmatpush1.msra.mxu0 0.0
    %2191 = vmatprep.subr.mxu0 0.0
    %2192 = vmatpush1.msra.mxu0 0.0
    %2193 = vmatprep.subr.mxu0 0.0
    %2194 = vmatpush1.msra.mxu0 0.0
    %2195 = vmatprep.subr.mxu0 0.0
    %2196 = vmatpush1.msra.mxu0 0.0
    %2197 = vmatprep.subr.mxu0 0.0
    %2198 = vmatpush1.msra.mxu0 0.0
    %2199 = vmatprep.subr.mxu0 0.0
    %2200 = vmatpush1.msra.mxu0 0.0
    %2201 = vmatprep.subr.mxu0 0.0
    %2202 = vmatpush1.msra.mxu0 0.0
    %2203 = vmatprep.subr.mxu0 0.0
    %2204 = vmatpush1.msra.mxu0 0.0
    %2205 = vmatprep.subr.mxu0 0.0
    %2206 = vmatpush1.msra.mxu0 0.0
    %2207 = vmatprep.subr.mxu0 0.0
    %2208 = vmatpush1.msra.mxu0 0.0
    %2209 = vmatprep.subr.mxu0 0.0
    %2210 = vmatpush1.msra.mxu0 0.0
    %2211 = vmatprep.subr.mxu0 0.0
    %2212 = vmatpush1.msra.mxu0 0.0
    %2213 = vmatprep.subr.mxu0 0.0
    %2214 = vmatpush1.msra.mxu0 0.0
    %2215 = vmatprep.mubr.f32.mxu0 0.0
    %2216 = vmatmul.mubr.f32.gmra.mrb[0].mxu0 %v2149
    %v2217 = vpop.f32.mrb[0].mxu0
    %v2218 = vadd.f32 0.0, %v2217
    %v2219 = vpop.f32.mrb[0].mxu0
    %2220 = vdwg.mxu0
    %s2221 = scalar_lea.vmem [#allocation4], 192
    %v2222 = vld [vmem:[%s2221] sm:$0xff]
    %v2223 = vld [vmem:[%s2221 + $0x8] sm:$0xff]
    %v2224 = vld [vmem:[%s2221 + $0x10] sm:$0xff]
    %v2225 = vld [vmem:[%s2221 + $0x18] sm:$0xff]
    %v2226 = vld [vmem:[%s2221 + $0x20] sm:$0xff]
    %v2227 = vld [vmem:[%s2221 + $0x28] sm:$0xff]
    %v2228 = vld [vmem:[%s2221 + $0x30] sm:$0xff]
    %v2229 = vld [vmem:[%s2221 + $0x38] sm:$0xff]
    %v2231 = vsel %vm261, %v2218, 0
    %2233 = vmatprep.subr.mxu0 0.0
    %2234 = vmatpush1.msra.mxu0 %v2222
    %2235 = vmatprep.subr.mxu0 0.0
    %2236 = vmatpush1.msra.mxu0 %v2223
    %2237 = vmatprep.subr.mxu0 0.0
    %2238 = vmatpush1.msra.mxu0 %v2224
    %2239 = vmatprep.subr.mxu0 0.0
    %2240 = vmatpush1.msra.mxu0 %v2225
    %2241 = vmatprep.subr.mxu0 0.0
    %2242 = vmatpush1.msra.mxu0 %v2226
    %2243 = vmatprep.subr.mxu0 0.0
    %2244 = vmatpush1.msra.mxu0 %v2227
    %2245 = vmatprep.subr.mxu0 0.0
    %2246 = vmatpush1.msra.mxu0 %v2228
    %2247 = vmatprep.subr.mxu0 0.0
    %2248 = vmatpush1.msra.mxu0 %v2229
    %2249 = vmatprep.subr.mxu0 0.0
    %2250 = vmatpush1.msra.mxu0 0.0
    %2251 = vmatprep.subr.mxu0 0.0
    %2252 = vmatpush1.msra.mxu0 0.0
    %2253 = vmatprep.subr.mxu0 0.0
    %2254 = vmatpush1.msra.mxu0 0.0
    %2255 = vmatprep.subr.mxu0 0.0
    %2256 = vmatpush1.msra.mxu0 0.0
    %2257 = vmatprep.subr.mxu0 0.0
    %2258 = vmatpush1.msra.mxu0 0.0
    %2259 = vmatprep.subr.mxu0 0.0
    %2260 = vmatpush1.msra.mxu0 0.0
    %2261 = vmatprep.subr.mxu0 0.0
    %2262 = vmatpush1.msra.mxu0 0.0
    %2263 = vmatprep.subr.mxu0 0.0
    %2264 = vmatpush1.msra.mxu0 0.0
    %2265 = vmatprep.subr.mxu0 0.0
    %2266 = vmatpush1.msra.mxu0 0.0
    %2267 = vmatprep.subr.mxu0 0.0
    %2268 = vmatpush1.msra.mxu0 0.0
    %2269 = vmatprep.subr.mxu0 0.0
    %2270 = vmatpush1.msra.mxu0 0.0
    %2271 = vmatprep.subr.mxu0 0.0
    %2272 = vmatpush1.msra.mxu0 0.0
    %2273 = vmatprep.subr.mxu0 0.0
    %2274 = vmatpush1.msra.mxu0 0.0
    %2275 = vmatprep.subr.mxu0 0.0
    %2276 = vmatpush1.msra.mxu0 0.0
    %2277 = vmatprep.subr.mxu0 0.0
    %2278 = vmatpush1.msra.mxu0 0.0
    %2279 = vmatprep.subr.mxu0 0.0
    %2280 = vmatpush1.msra.mxu0 0.0
    %2281 = vmatprep.subr.mxu0 0.0
    %2282 = vmatpush1.msra.mxu0 0.0
    %2283 = vmatprep.subr.mxu0 0.0
    %2284 = vmatpush1.msra.mxu0 0.0
    %2285 = vmatprep.subr.mxu0 0.0
    %2286 = vmatpush1.msra.mxu0 0.0
    %2287 = vmatprep.subr.mxu0 0.0
    %2288 = vmatpush1.msra.mxu0 0.0
    %2289 = vmatprep.subr.mxu0 0.0
    %2290 = vmatpush1.msra.mxu0 0.0
    %2291 = vmatprep.subr.mxu0 0.0
    %2292 = vmatpush1.msra.mxu0 0.0
    %2293 = vmatprep.subr.mxu0 0.0
    %2294 = vmatpush1.msra.mxu0 0.0
    %2295 = vmatprep.subr.mxu0 0.0
    %2296 = vmatpush1.msra.mxu0 0.0
    %2297 = vmatprep.mubr.f32.mxu0 0.0
    %2298 = vmatmul.mubr.f32.gmra.mrb[0].mxu0 %v2231
    %v2299 = vpop.f32.mrb[0].mxu0
    %v2300 = vadd.f32 0.0, %v2299
    %v2301 = vpop.f32.mrb[0].mxu0
    %2302 = vdwg.mxu0
    %v2303 = vadd.f32 %v2145, %v2300
    %vm2304 = vcmask 519168
    %v2305 = vsel %vm2304, %v2303, 0.0
    %v2306 = vrot.slane %v2305, 4
    %v2307 = vadd.f32 %v2305, %v2306
    %v2308 = vrot.slane %v2307, 2
    %v2309 = vadd.f32 %v2307, %v2308
    %v2310 = vrot.slane %v2309, 1
    %v2311 = vadd.f32 %v2309, %v2310
    %v2312 = vmul.f32 %v2303, %v2303
    %v2313 = vsel %vm2304, %v2312, 0.0
    %v2314 = vrot.slane %v2313, 4
    %v2315 = vadd.f32 %v2313, %v2314
    %v2316 = vrot.slane %v2315, 2
    %v2317 = vadd.f32 %v2315, %v2316
    %v2318 = vrot.slane %v2317, 1
    %v2319 = vadd.f32 %v2317, %v2318
    %2321 = vrot.lane.b32.xlu0 %v2311, 96
    %v2322 = vpop.permute.xlu0 %2321
    %v2324 = vadd.f32 %v2311, %v2322
    %2326 = vrot.lane.b32.xlu0 %v2319, 96
    %v2327 = vpop.permute.xlu0 %2326
    %v2329 = vadd.f32 %v2319, %v2327
    %v2330 = vmul.f32 %v2324, 0.125
    %v2331 = vmul.f32 %v2329, 0.125
    %v2332 = vmul.f32 %v2330, %v2330
    %v2333 = vsub.f32 %v2331, %v2332
    %v2334 = vld [vmem:[%s11] sm:$0x1]
    %v2335 = vadd.f32 %v2333, 1e-05
    %v2336 = vrsqrt.pop %v2335
    %v2337 = vmul.f32 %v2334, %v2336
    %v2338 = vld [vmem:[%s12] sm:$0x1]
    %v2339 = vmul.f32 %v2330, %v2337
    %v2340 = vsub.f32 %v2338, %v2339
    %v2342 = vlaneseq
    %v2343 = vshrl.u32 %v2342, 7
    %v2344 = vsub.s32 0, %v2343
    %v2345 = vrot.slane %v2337, %v2344
    %2346 = vrot.lane.b32.xlu0 %v2345, 32
    %v2347 = vpop.permute.xlu0 %2346
    %v2349 = vsel %vm78, %v2337, %v2347
    %v2351 = vlaneseq
    %v2352 = vshrl.u32 %v2351, 7
    %v2353 = vsub.s32 0, %v2352
    %v2354 = vrot.slane %v2340, %v2353
    %2355 = vrot.lane.b32.xlu0 %v2354, 32
    %v2356 = vpop.permute.xlu0 %2355
    %v2358 = vsel %vm78, %v2340, %v2356
    %v2359 = vlaneseq
    %v2360 = vshrl.u32 %v2359, 7
    %v2361 = vsub.s32 0, %v2360
    %v2362 = vrot.slane %v2349, %v2361
    %v2363 = vmul.f32 %v2303, %v2362
    %v2364 = vlaneseq
    %v2365 = vshrl.u32 %v2364, 7
    %v2366 = vsub.s32 0, %v2365
    %v2367 = vrot.slane %v2358, %v2366
    %v2368 = vadd.f32 %v2363, %v2367
    %v2369 = vmax.f32 %v2368, 0.0
    %2370 = vst.msk [vmem:[%s13] sm:$0xf] %vm2304, %v2369
    // Predicated region
    $region62: #{forward.1} parent=1 // pred_check
      _
    $region63: #{forward.1} parent=1 // pred_check_branch
      %2372 = sbr.rel (0) target = $region65
    $region64: #{forward.1} parent=1 // pred_region
      _
    $region65: #{forward.1} parent=1 // pred_fallthru
      _
    // Predicated region
    $region66: #{forward.1} parent=1 // pred_check
      _
    $region67: #{forward.1} parent=1 // pred_check_branch
      %2374 = sbr.rel (0) target = $region69
    $region68: #{forward.1} parent=1 // pred_region
      _
    $region69: #{forward.1} parent=1 // pred_fallthru
      _
    %2375 = vsyncpa [#allocation3], 1
    %2376 = vsyncpa [#allocation5], 1

</llo_original>
